<compile_context>
chip_gen: v7x
topology: tpu7x:2x2x1
jax: 0.10.0
libtpu: 0.0.40
codegen_flags: <defaults>
</compile_context>

<pallas_src>
import jax
import jax.numpy as jnp
import numpy as np
from jax import lax
from jax.experimental import pallas as pl
from jax.experimental.pallas import tpu as pltpu


def lstm_fc_kernel(x_ref,       # (T, B, I)  f32, time-major
                   w_ih0_ref,   # (I, 4H)    f32
                   w_hh0_ref,   # (H, 4H)    bf16
                   b0_ref,      # (1, 4H)    f32   (b_ih0 + b_hh0)
                   w_ih1_ref,   # (H, 4H)    bf16
                   w_hh1_ref,   # (H, 4H)    bf16
                   b1_ref,      # (1, 4H)    f32   (b_ih1 + b_hh1)
                   w_fc_ref,    # (H, Cp)    f32   (Cp = 128, zero-padded)
                   b_fc_ref,    # (1, Cp)    f32
                   out_ref,     # (B, Cp)    f32
                   xg0_ref):    # scratch VMEM (T, B, 4H) f32
    T, B, I = x_ref.shape
    H = w_hh0_ref.shape[0]

    # --- Hoisted layer-0 input projection (time-major, written once to scratch).
    if I == 1:
        # Outer product: VPU broadcast multiply instead of a K=1 MXU push.
        xg0_ref[...] = (x_ref[...] * w_ih0_ref[...].reshape(1, 1, 4 * H)
                        + b0_ref[...].reshape(1, 1, 4 * H))
    else:
        x_all = x_ref[...].reshape(T * B, I)
        xg0_ref[...] = (jnp.dot(x_all, w_ih0_ref[...],
                                preferred_element_type=jnp.float32)
                        + b0_ref[...]).reshape(T, B, 4 * H)

    def activate(gates, c):
        # PyTorch gate order along the 4H axis: [i, f, g, o]. All math in f32.
        i = jax.nn.sigmoid(gates[:, 0 * H:1 * H])
        f = jax.nn.sigmoid(gates[:, 1 * H:2 * H])
        g = jnp.tanh(gates[:, 2 * H:3 * H])
        o = jax.nn.sigmoid(gates[:, 3 * H:4 * H])
        c_new = f * c + i * g
        h_new = o * jnp.tanh(c_new)
        return h_new, c_new

    b1 = b1_ref[...]                                   # (1, 4H), 2 vregs
    z = jnp.zeros((B, H), jnp.float32)
    h0, c0, h1, c1 = z, z, z, z

    # Fully unrolled time loop (T static and small). Per step:
    #   * layer-1 hh partial (depends only on h1_{t-1}) issued first -> overlaps
    #   * layer-0: (B,H)@(H,4H) bf16 dot (input projection pre-hoisted in scratch)
    #   * layer-1: (B,H)@(H,4H) bf16 dot on the dependent chain
    for t in range(T):
        g1_hh = (jnp.dot(h1.astype(jnp.bfloat16), w_hh1_ref[...],
                         preferred_element_type=jnp.float32) + b1)

        g0 = xg0_ref[t] + jnp.dot(h0.astype(jnp.bfloat16), w_hh0_ref[...],
                                  preferred_element_type=jnp.float32)
        h0, c0 = activate(g0, c0)

        g1 = g1_hh + jnp.dot(h0.astype(jnp.bfloat16), w_ih1_ref[...],
                             preferred_element_type=jnp.float32)
        h1, c1 = activate(g1, c1)

    # out = h1_last @ W_fc^T + b_fc   (lane-dense, unmasked store; f32 weights)
    out_ref[...] = (jnp.dot(h1, w_fc_ref[...],
                            preferred_element_type=jnp.float32)
                    + b_fc_ref[...]).astype(out_ref.dtype)


def ecg_rnn_forward(x, params):
    """x: (B, T, I) float32 (batch_first). Returns (B, num_classes) float32."""
    B, T, I = x.shape
    H = params["w_hh_l0"].shape[0]
    C = params["w_fc"].shape[1]

    # Fill f32 sublanes: pad batch to a multiple of 8. Padded rows compute garbage
    # h/c but are row-independent and sliced off. Larger real batches (toward
    # 128/256 MXU rows) scale throughput nearly for free.
    B_pad = max(8, ((B + 7) // 8) * 8)
    # Lane-dense output: pad class dim to 128 so the final store is unmasked.
    C_pad = max(128, ((C + 127) // 128) * 128)

    # Time-major input (tiny transpose done once in the XLA wrapper).
    x_tm = jnp.zeros((T, B_pad, I), jnp.float32).at[:, :B, :].set(
        jnp.transpose(x.astype(jnp.float32), (1, 0, 2)))

    # bf16 operands for the recurrent MXU dots (accumulation stays f32 in-kernel).
    w_hh0 = params["w_hh_l0"].astype(jnp.bfloat16)
    w_ih1 = params["w_ih_l1"].astype(jnp.bfloat16)
    w_hh1 = params["w_hh_l1"].astype(jnp.bfloat16)

    w_fc_p = jnp.zeros((H, C_pad), jnp.float32).at[:, :C].set(params["w_fc"])
    b_fc_p = jnp.zeros((1, C_pad), jnp.float32).at[:, :C].set(params["b_fc"])

    full = lambda shape: pl.BlockSpec(shape, lambda i, s=shape: (0,) * len(s))
    in_specs = [
        full((T, B_pad, I)),
        full((I, 4 * H)), full((H, 4 * H)), full((1, 4 * H)),
        full((H, 4 * H)), full((H, 4 * H)), full((1, 4 * H)),
        full((H, C_pad)), full((1, C_pad)),
    ]
    out_specs = full((B_pad, C_pad))

    # NOTE: at B_pad=8 there is nothing to split across v7x's two TensorCores;
    # with large batches, add a leading "parallel" grid axis over batch tiles.
    out = pl.pallas_call(
        lstm_fc_kernel,
        out_shape=jax.ShapeDtypeStruct((B_pad, C_pad), jnp.float32),
        grid=(1,),
        in_specs=in_specs,
        out_specs=out_specs,
        scratch_shapes=[pltpu.VMEM((T, B_pad, 4 * H), jnp.float32)],
        compiler_params=pltpu.CompilerParams(
            dimension_semantics=("arbitrary",)),
    )(x_tm,
      params["w_ih_l0"], w_hh0, params["b_l0"],
      w_ih1, w_hh1, params["b_l1"],
      w_fc_p, b_fc_p)
    return out[:B, :C]


def init_params(key, input_size, hidden_size, num_classes):
    """Deterministic init, PyTorch-style U(-1/sqrt(H), 1/sqrt(H)).
    Weights stored pre-transposed for the kernel (row-major matmuls)."""
    H = hidden_size
    k = 1.0 / np.sqrt(H)
    keys = jax.random.split(key, 12)
    u = lambda kk, shape: jax.random.uniform(kk, shape, jnp.float32, -k, k)

    # layer 0: W_ih (4H, I), W_hh (4H, H), b_ih (4H,), b_hh (4H,)
    w_ih0 = u(keys[0], (4 * H, input_size))
    w_hh0 = u(keys[1], (4 * H, H))
    b0 = u(keys[2], (4 * H,)) + u(keys[3], (4 * H,))
    # layer 1: input is H
    w_ih1 = u(keys[4], (4 * H, H))
    w_hh1 = u(keys[5], (4 * H, H))
    b1 = u(keys[6], (4 * H,)) + u(keys[7], (4 * H,))
    # fc: W (C, H), b (C,)
    kf = 1.0 / np.sqrt(H)
    w_fc = jax.random.uniform(keys[8], (num_classes, H), jnp.float32, -kf, kf)
    b_fc = jax.random.uniform(keys[9], (num_classes,), jnp.float32, -kf, kf)

    return {
        "w_ih_l0": w_ih0.T, "w_hh_l0": w_hh0.T, "b_l0": b0.reshape(1, -1),
        "w_ih_l1": w_ih1.T, "w_hh_l1": w_hh1.T, "b_l1": b1.reshape(1, -1),
        "w_fc": w_fc.T, "b_fc": b_fc.reshape(1, -1),
    }


def ref_forward(x, p):
    """Pure-JAX f32 reference of the same 2-layer LSTM + FC (PyTorch semantics)."""
    B, T, I = x.shape
    H = p["w_hh_l0"].shape[0]

    def run_layer(inp, w_ih, w_hh, b):
        def step(carry, x_t):
            h, c = carry
            gates = x_t @ w_ih + h @ w_hh + b
            i, f, g, o = jnp.split(gates, 4, axis=-1)
            i = jax.nn.sigmoid(i); f = jax.nn.sigmoid(f)
            g = jnp.tanh(g); o = jax.nn.sigmoid(o)
            c = f * c + i * g
            h = o * jnp.tanh(c)
            return (h, c), h
        h0 = jnp.zeros((B, H), jnp.float32)
        c0 = jnp.zeros((B, H), jnp.float32)
        (_, _), hs = lax.scan(step, (h0, c0), jnp.transpose(inp, (1, 0, 2)))
        return jnp.transpose(hs, (1, 0, 2))

    out0 = run_layer(x, p["w_ih_l0"], p["w_hh_l0"], p["b_l0"])
    out1 = run_layer(out0, p["w_ih_l1"], p["w_hh_l1"], p["b_l1"])
    return out1[:, -1, :] @ p["w_fc"] + p["b_fc"]


if __name__ == "__main__":
    # Small shapes consistent with ECG_RNN defaults:
    # input_size=1 (single ECG channel), hidden_size=64, num_layers=2, num_classes=5.
    B, T, I = 2, 8, 1
    H, C = 64, 5

    key = jax.random.PRNGKey(0)
    k_x, k_p = jax.random.split(key)
    x = jax.random.normal(k_x, (B, T, I), jnp.float32)
    params = init_params(k_p, I, H, C)

    out = ecg_rnn_forward(x, params)
    out = jax.block_until_ready(out)

    expected = jax.block_until_ready(ref_forward(x, params))
    assert out.shape == (B, C)
    # Tolerance slightly relaxed vs. the pure-f32 version: recurrent matmul
    # operands are bf16 (f32 accumulation / f32 gate math). Skip the bf16 casts
    # in ecg_rnn_forward for exact f32 parity.
    np.testing.assert_allclose(np.asarray(out), np.asarray(expected),
                               rtol=2e-3, atol=2e-3)
    print("KERNEL_OK")
</pallas_src>

<mosaic_0001>
module attributes {stable_mosaic.version = 11 : i64} {
  func.func @lstm_fc_kernel(%arg0: i32, %arg1: memref<8x8x1xf32, #tpu.memory_space<vmem>>, %arg2: memref<1x256xf32, #tpu.memory_space<vmem>>, %arg3: memref<64x256xbf16, #tpu.memory_space<vmem>>, %arg4: memref<1x256xf32, #tpu.memory_space<vmem>>, %arg5: memref<64x256xbf16, #tpu.memory_space<vmem>>, %arg6: memref<64x256xbf16, #tpu.memory_space<vmem>>, %arg7: memref<1x256xf32, #tpu.memory_space<vmem>>, %arg8: memref<64x128xf32, #tpu.memory_space<vmem>>, %arg9: memref<1x128xf32, #tpu.memory_space<vmem>>, %arg10: memref<8x128xf32, #tpu.memory_space<vmem>>, %arg11: memref<8x8x256xf32, #tpu.memory_space<vmem>>) attributes {dimension_semantics = [#tpu.dimension_semantics<arbitrary>], iteration_bounds = array<i64: 1>, scalar_prefetch = 0 : i64, scratch_operands = 1 : i64, tpu.core_type = #tpu.core_type<tc>, window_params = [{pipeline_mode = #tpu.pipeline_mode<synchronous>, transform_indices = @transform_0, window_bounds = array<i64: 8, 8, 1>}, {pipeline_mode = #tpu.pipeline_mode<synchronous>, transform_indices = @transform_1, window_bounds = array<i64: 1, 256>}, {pipeline_mode = #tpu.pipeline_mode<synchronous>, transform_indices = @transform_2, window_bounds = array<i64: 64, 256>}, {pipeline_mode = #tpu.pipeline_mode<synchronous>, transform_indices = @transform_3, window_bounds = array<i64: 1, 256>}, {pipeline_mode = #tpu.pipeline_mode<synchronous>, transform_indices = @transform_4, window_bounds = array<i64: 64, 256>}, {pipeline_mode = #tpu.pipeline_mode<synchronous>, transform_indices = @transform_5, window_bounds = array<i64: 64, 256>}, {pipeline_mode = #tpu.pipeline_mode<synchronous>, transform_indices = @transform_6, window_bounds = array<i64: 1, 256>}, {pipeline_mode = #tpu.pipeline_mode<synchronous>, transform_indices = @transform_7, window_bounds = array<i64: 64, 128>}, {pipeline_mode = #tpu.pipeline_mode<synchronous>, transform_indices = @transform_8, window_bounds = array<i64: 1, 128>}, {pipeline_mode = #tpu.pipeline_mode<synchronous>, transform_indices = @transform_9, window_bounds = array<i64: 8, 128>}]} {
    %c0 = arith.constant 0 : index
    %c0_0 = arith.constant 0 : index
    %c0_1 = arith.constant 0 : index
    %0 = vector.load %arg1[%c0, %c0_0, %c0_1] : memref<8x8x1xf32, #tpu.memory_space<vmem>>, vector<8x8x1xf32>
    %c0_2 = arith.constant 0 : index
    %c0_3 = arith.constant 0 : index
    %1 = vector.load %arg2[%c0_2, %c0_3] : memref<1x256xf32, #tpu.memory_space<vmem>>, vector<1x256xf32>
    %2 = vector.shape_cast %1 : vector<1x256xf32> to vector<1x1x256xf32>
    %3 = vector.broadcast %0 : vector<8x8x1xf32> to vector<8x8x256xf32>
    %4 = vector.broadcast %2 : vector<1x1x256xf32> to vector<8x8x256xf32>
    %5 = arith.mulf %3, %4 : vector<8x8x256xf32>
    %c0_4 = arith.constant 0 : index
    %c0_5 = arith.constant 0 : index
    %6 = vector.load %arg4[%c0_4, %c0_5] : memref<1x256xf32, #tpu.memory_space<vmem>>, vector<1x256xf32>
    %7 = vector.shape_cast %6 : vector<1x256xf32> to vector<1x1x256xf32>
    %8 = vector.broadcast %7 : vector<1x1x256xf32> to vector<8x8x256xf32>
    %9 = arith.addf %5, %8 : vector<8x8x256xf32>
    %c0_6 = arith.constant 0 : index
    %c0_7 = arith.constant 0 : index
    %c0_8 = arith.constant 0 : index
    %10 = vector.load %arg11[%c0_6, %c0_7, %c0_8] : memref<8x8x256xf32, #tpu.memory_space<vmem>>, vector<8x8x256xf32>
    tpu.vector_store %arg11[%c0_6, %c0_7, %c0_8], %9 {strides = array<i32>} : memref<8x8x256xf32, #tpu.memory_space<vmem>>, vector<8x8x256xf32>,
    %c0_9 = arith.constant 0 : index
    %c0_10 = arith.constant 0 : index
    %11 = vector.load %arg7[%c0_9, %c0_10] : memref<1x256xf32, #tpu.memory_space<vmem>>, vector<1x256xf32>
    %cst = arith.constant 0.000000e+00 : f32
    %12 = vector.broadcast %cst : f32 to vector<8x64xf32>
    %13 = arith.truncf %12 : vector<8x64xf32> to vector<8x64xbf16>
    %c0_11 = arith.constant 0 : index
    %c0_12 = arith.constant 0 : index
    %14 = vector.load %arg6[%c0_11, %c0_12] : memref<64x256xbf16, #tpu.memory_space<vmem>>, vector<64x256xbf16>
    %cst_13 = arith.constant dense<0.000000e+00> : vector<8x256xf32>
    %15 = tpu.matmul %13, %14, %cst_13 {dimension_numbers = #tpu.dot_dimension_numbers<[1], [0], [0], [1], [0, 0, 1, 1], [], []>} : vector<8x64xbf16>, vector<64x256xbf16>, vector<8x256xf32> -> vector<8x256xf32>
    %16 = vector.broadcast %11 : vector<1x256xf32> to vector<8x256xf32>
    %17 = arith.addf %15, %16 : vector<8x256xf32>
    %c0_14 = arith.constant 0 : index
    %c0_15 = arith.constant 0 : index
    %c0_16 = arith.constant 0 : index
    %18 = vector.load %arg11[%c0_14, %c0_15, %c0_16] : memref<8x8x256xf32, #tpu.memory_space<vmem>>, vector<1x8x256xf32>
    %19 = vector.shape_cast %18 : vector<1x8x256xf32> to vector<8x256xf32>
    %20 = arith.truncf %12 : vector<8x64xf32> to vector<8x64xbf16>
    %c0_17 = arith.constant 0 : index
    %c0_18 = arith.constant 0 : index
    %21 = vector.load %arg3[%c0_17, %c0_18] : memref<64x256xbf16, #tpu.memory_space<vmem>>, vector<64x256xbf16>
    %cst_19 = arith.constant dense<0.000000e+00> : vector<8x256xf32>
    %22 = tpu.matmul %20, %21, %cst_19 {dimension_numbers = #tpu.dot_dimension_numbers<[1], [0], [0], [1], [0, 0, 1, 1], [], []>} : vector<8x64xbf16>, vector<64x256xbf16>, vector<8x256xf32> -> vector<8x256xf32>
    %23 = arith.addf %19, %22 : vector<8x256xf32>
    %24 = vector.extract_strided_slice %23 {offsets = [0, 0], sizes = [8, 64], strides = [1, 1]} : vector<8x256xf32> to vector<8x64xf32>
    %25 = arith.negf %24 : vector<8x64xf32>
    %26 = math.exp %25 : vector<8x64xf32>
    %cst_20 = arith.constant 1.000000e+00 : f32
    %27 = vector.broadcast %cst_20 : f32 to vector<8x64xf32>
    %28 = arith.addf %27, %26 : vector<8x64xf32>
    %29 = arith.divf %27, %28 : vector<8x64xf32>
    %30 = vector.extract_strided_slice %23 {offsets = [0, 64], sizes = [8, 64], strides = [1, 1]} : vector<8x256xf32> to vector<8x64xf32>
    %31 = arith.negf %30 : vector<8x64xf32>
    %32 = math.exp %31 : vector<8x64xf32>
    %cst_21 = arith.constant 1.000000e+00 : f32
    %33 = vector.broadcast %cst_21 : f32 to vector<8x64xf32>
    %34 = arith.addf %33, %32 : vector<8x64xf32>
    %35 = arith.divf %33, %34 : vector<8x64xf32>
    %36 = vector.extract_strided_slice %23 {offsets = [0, 128], sizes = [8, 64], strides = [1, 1]} : vector<8x256xf32> to vector<8x64xf32>
    %37 = math.tanh %36 : vector<8x64xf32>
    %38 = vector.extract_strided_slice %23 {offsets = [0, 192], sizes = [8, 64], strides = [1, 1]} : vector<8x256xf32> to vector<8x64xf32>
    %39 = arith.negf %38 : vector<8x64xf32>
    %40 = math.exp %39 : vector<8x64xf32>
    %cst_22 = arith.constant 1.000000e+00 : f32
    %41 = vector.broadcast %cst_22 : f32 to vector<8x64xf32>
    %42 = arith.addf %41, %40 : vector<8x64xf32>
    %43 = arith.divf %41, %42 : vector<8x64xf32>
    %44 = arith.mulf %35, %12 : vector<8x64xf32>
    %45 = arith.mulf %29, %37 : vector<8x64xf32>
    %46 = arith.addf %44, %45 : vector<8x64xf32>
    %47 = math.tanh %46 : vector<8x64xf32>
    %48 = arith.mulf %43, %47 : vector<8x64xf32>
    %49 = arith.truncf %48 : vector<8x64xf32> to vector<8x64xbf16>
    %c0_23 = arith.constant 0 : index
    %c0_24 = arith.constant 0 : index
    %50 = vector.load %arg5[%c0_23, %c0_24] : memref<64x256xbf16, #tpu.memory_space<vmem>>, vector<64x256xbf16>
    %cst_25 = arith.constant dense<0.000000e+00> : vector<8x256xf32>
    %51 = tpu.matmul %49, %50, %cst_25 {dimension_numbers = #tpu.dot_dimension_numbers<[1], [0], [0], [1], [0, 0, 1, 1], [], []>} : vector<8x64xbf16>, vector<64x256xbf16>, vector<8x256xf32> -> vector<8x256xf32>
    %52 = arith.addf %17, %51 : vector<8x256xf32>
    %53 = vector.extract_strided_slice %52 {offsets = [0, 0], sizes = [8, 64], strides = [1, 1]} : vector<8x256xf32> to vector<8x64xf32>
    %54 = arith.negf %53 : vector<8x64xf32>
    %55 = math.exp %54 : vector<8x64xf32>
    %cst_26 = arith.constant 1.000000e+00 : f32
    %56 = vector.broadcast %cst_26 : f32 to vector<8x64xf32>
    %57 = arith.addf %56, %55 : vector<8x64xf32>
    %58 = arith.divf %56, %57 : vector<8x64xf32>
    %59 = vector.extract_strided_slice %52 {offsets = [0, 64], sizes = [8, 64], strides = [1, 1]} : vector<8x256xf32> to vector<8x64xf32>
    %60 = arith.negf %59 : vector<8x64xf32>
    %61 = math.exp %60 : vector<8x64xf32>
    %cst_27 = arith.constant 1.000000e+00 : f32
    %62 = vector.broadcast %cst_27 : f32 to vector<8x64xf32>
    %63 = arith.addf %62, %61 : vector<8x64xf32>
    %64 = arith.divf %62, %63 : vector<8x64xf32>
    %65 = vector.extract_strided_slice %52 {offsets = [0, 128], sizes = [8, 64], strides = [1, 1]} : vector<8x256xf32> to vector<8x64xf32>
    %66 = math.tanh %65 : vector<8x64xf32>
    %67 = vector.extract_strided_slice %52 {offsets = [0, 192], sizes = [8, 64], strides = [1, 1]} : vector<8x256xf32> to vector<8x64xf32>
    %68 = arith.negf %67 : vector<8x64xf32>
    %69 = math.exp %68 : vector<8x64xf32>
    %cst_28 = arith.constant 1.000000e+00 : f32
    %70 = vector.broadcast %cst_28 : f32 to vector<8x64xf32>
    %71 = arith.addf %70, %69 : vector<8x64xf32>
    %72 = arith.divf %70, %71 : vector<8x64xf32>
    %73 = arith.mulf %64, %12 : vector<8x64xf32>
    %74 = arith.mulf %58, %66 : vector<8x64xf32>
    %75 = arith.addf %73, %74 : vector<8x64xf32>
    %76 = math.tanh %75 : vector<8x64xf32>
    %77 = arith.mulf %72, %76 : vector<8x64xf32>
    %78 = arith.truncf %77 : vector<8x64xf32> to vector<8x64xbf16>
    %c0_29 = arith.constant 0 : index
    %c0_30 = arith.constant 0 : index
    %79 = vector.load %arg6[%c0_29, %c0_30] : memref<64x256xbf16, #tpu.memory_space<vmem>>, vector<64x256xbf16>
    %cst_31 = arith.constant dense<0.000000e+00> : vector<8x256xf32>
    %80 = tpu.matmul %78, %79, %cst_31 {dimension_numbers = #tpu.dot_dimension_numbers<[1], [0], [0], [1], [0, 0, 1, 1], [], []>} : vector<8x64xbf16>, vector<64x256xbf16>, vector<8x256xf32> -> vector<8x256xf32>
    %81 = vector.broadcast %11 : vector<1x256xf32> to vector<8x256xf32>
    %82 = arith.addf %80, %81 : vector<8x256xf32>
    %c1 = arith.constant 1 : index
    %c0_32 = arith.constant 0 : index
    %c0_33 = arith.constant 0 : index
    %83 = vector.load %arg11[%c1, %c0_32, %c0_33] : memref<8x8x256xf32, #tpu.memory_space<vmem>>, vector<1x8x256xf32>
    %84 = vector.shape_cast %83 : vector<1x8x256xf32> to vector<8x256xf32>
    %85 = arith.truncf %48 : vector<8x64xf32> to vector<8x64xbf16>
    %c0_34 = arith.constant 0 : index
    %c0_35 = arith.constant 0 : index
    %86 = vector.load %arg3[%c0_34, %c0_35] : memref<64x256xbf16, #tpu.memory_space<vmem>>, vector<64x256xbf16>
    %cst_36 = arith.constant dense<0.000000e+00> : vector<8x256xf32>
    %87 = tpu.matmul %85, %86, %cst_36 {dimension_numbers = #tpu.dot_dimension_numbers<[1], [0], [0], [1], [0, 0, 1, 1], [], []>} : vector<8x64xbf16>, vector<64x256xbf16>, vector<8x256xf32> -> vector<8x256xf32>
    %88 = arith.addf %84, %87 : vector<8x256xf32>
    %89 = vector.extract_strided_slice %88 {offsets = [0, 0], sizes = [8, 64], strides = [1, 1]} : vector<8x256xf32> to vector<8x64xf32>
    %90 = arith.negf %89 : vector<8x64xf32>
    %91 = math.exp %90 : vector<8x64xf32>
    %cst_37 = arith.constant 1.000000e+00 : f32
    %92 = vector.broadcast %cst_37 : f32 to vector<8x64xf32>
    %93 = arith.addf %92, %91 : vector<8x64xf32>
    %94 = arith.divf %92, %93 : vector<8x64xf32>
    %95 = vector.extract_strided_slice %88 {offsets = [0, 64], sizes = [8, 64], strides = [1, 1]} : vector<8x256xf32> to vector<8x64xf32>
    %96 = arith.negf %95 : vector<8x64xf32>
    %97 = math.exp %96 : vector<8x64xf32>
    %cst_38 = arith.constant 1.000000e+00 : f32
    %98 = vector.broadcast %cst_38 : f32 to vector<8x64xf32>
    %99 = arith.addf %98, %97 : vector<8x64xf32>
    %100 = arith.divf %98, %99 : vector<8x64xf32>
    %101 = vector.extract_strided_slice %88 {offsets = [0, 128], sizes = [8, 64], strides = [1, 1]} : vector<8x256xf32> to vector<8x64xf32>
    %102 = math.tanh %101 : vector<8x64xf32>
    %103 = vector.extract_strided_slice %88 {offsets = [0, 192], sizes = [8, 64], strides = [1, 1]} : vector<8x256xf32> to vector<8x64xf32>
    %104 = arith.negf %103 : vector<8x64xf32>
    %105 = math.exp %104 : vector<8x64xf32>
    %cst_39 = arith.constant 1.000000e+00 : f32
    %106 = vector.broadcast %cst_39 : f32 to vector<8x64xf32>
    %107 = arith.addf %106, %105 : vector<8x64xf32>
    %108 = arith.divf %106, %107 : vector<8x64xf32>
    %109 = arith.mulf %100, %46 : vector<8x64xf32>
    %110 = arith.mulf %94, %102 : vector<8x64xf32>
    %111 = arith.addf %109, %110 : vector<8x64xf32>
    %112 = math.tanh %111 : vector<8x64xf32>
    %113 = arith.mulf %108, %112 : vector<8x64xf32>
    %114 = arith.truncf %113 : vector<8x64xf32> to vector<8x64xbf16>
    %c0_40 = arith.constant 0 : index
    %c0_41 = arith.constant 0 : index
    %115 = vector.load %arg5[%c0_40, %c0_41] : memref<64x256xbf16, #tpu.memory_space<vmem>>, vector<64x256xbf16>
    %cst_42 = arith.constant dense<0.000000e+00> : vector<8x256xf32>
    %116 = tpu.matmul %114, %115, %cst_42 {dimension_numbers = #tpu.dot_dimension_numbers<[1], [0], [0], [1], [0, 0, 1, 1], [], []>} : vector<8x64xbf16>, vector<64x256xbf16>, vector<8x256xf32> -> vector<8x256xf32>
    %117 = arith.addf %82, %116 : vector<8x256xf32>
    %118 = vector.extract_strided_slice %117 {offsets = [0, 0], sizes = [8, 64], strides = [1, 1]} : vector<8x256xf32> to vector<8x64xf32>
    %119 = arith.negf %118 : vector<8x64xf32>
    %120 = math.exp %119 : vector<8x64xf32>
    %cst_43 = arith.constant 1.000000e+00 : f32
    %121 = vector.broadcast %cst_43 : f32 to vector<8x64xf32>
    %122 = arith.addf %121, %120 : vector<8x64xf32>
    %123 = arith.divf %121, %122 : vector<8x64xf32>
    %124 = vector.extract_strided_slice %117 {offsets = [0, 64], sizes = [8, 64], strides = [1, 1]} : vector<8x256xf32> to vector<8x64xf32>
    %125 = arith.negf %124 : vector<8x64xf32>
    %126 = math.exp %125 : vector<8x64xf32>
    %cst_44 = arith.constant 1.000000e+00 : f32
    %127 = vector.broadcast %cst_44 : f32 to vector<8x64xf32>
    %128 = arith.addf %127, %126 : vector<8x64xf32>
    %129 = arith.divf %127, %128 : vector<8x64xf32>
    %130 = vector.extract_strided_slice %117 {offsets = [0, 128], sizes = [8, 64], strides = [1, 1]} : vector<8x256xf32> to vector<8x64xf32>
    %131 = math.tanh %130 : vector<8x64xf32>
    %132 = vector.extract_strided_slice %117 {offsets = [0, 192], sizes = [8, 64], strides = [1, 1]} : vector<8x256xf32> to vector<8x64xf32>
    %133 = arith.negf %132 : vector<8x64xf32>
    %134 = math.exp %133 : vector<8x64xf32>
    %cst_45 = arith.constant 1.000000e+00 : f32
    %135 = vector.broadcast %cst_45 : f32 to vector<8x64xf32>
    %136 = arith.addf %135, %134 : vector<8x64xf32>
    %137 = arith.divf %135, %136 : vector<8x64xf32>
    %138 = arith.mulf %129, %75 : vector<8x64xf32>
    %139 = arith.mulf %123, %131 : vector<8x64xf32>
    %140 = arith.addf %138, %139 : vector<8x64xf32>
    %141 = math.tanh %140 : vector<8x64xf32>
    %142 = arith.mulf %137, %141 : vector<8x64xf32>
    %143 = arith.truncf %142 : vector<8x64xf32> to vector<8x64xbf16>
    %c0_46 = arith.constant 0 : index
    %c0_47 = arith.constant 0 : index
    %144 = vector.load %arg6[%c0_46, %c0_47] : memref<64x256xbf16, #tpu.memory_space<vmem>>, vector<64x256xbf16>
    %cst_48 = arith.constant dense<0.000000e+00> : vector<8x256xf32>
    %145 = tpu.matmul %143, %144, %cst_48 {dimension_numbers = #tpu.dot_dimension_numbers<[1], [0], [0], [1], [0, 0, 1, 1], [], []>} : vector<8x64xbf16>, vector<64x256xbf16>, vector<8x256xf32> -> vector<8x256xf32>
    %146 = vector.broadcast %11 : vector<1x256xf32> to vector<8x256xf32>
    %147 = arith.addf %145, %146 : vector<8x256xf32>
    %c2 = arith.constant 2 : index
    %c0_49 = arith.constant 0 : index
    %c0_50 = arith.constant 0 : index
    %148 = vector.load %arg11[%c2, %c0_49, %c0_50] : memref<8x8x256xf32, #tpu.memory_space<vmem>>, vector<1x8x256xf32>
    %149 = vector.shape_cast %148 : vector<1x8x256xf32> to vector<8x256xf32>
    %150 = arith.truncf %113 : vector<8x64xf32> to vector<8x64xbf16>
    %c0_51 = arith.constant 0 : index
    %c0_52 = arith.constant 0 : index
    %151 = vector.load %arg3[%c0_51, %c0_52] : memref<64x256xbf16, #tpu.memory_space<vmem>>, vector<64x256xbf16>
    %cst_53 = arith.constant dense<0.000000e+00> : vector<8x256xf32>
    %152 = tpu.matmul %150, %151, %cst_53 {dimension_numbers = #tpu.dot_dimension_numbers<[1], [0], [0], [1], [0, 0, 1, 1], [], []>} : vector<8x64xbf16>, vector<64x256xbf16>, vector<8x256xf32> -> vector<8x256xf32>
    %153 = arith.addf %149, %152 : vector<8x256xf32>
    %154 = vector.extract_strided_slice %153 {offsets = [0, 0], sizes = [8, 64], strides = [1, 1]} : vector<8x256xf32> to vector<8x64xf32>
    %155 = arith.negf %154 : vector<8x64xf32>
    %156 = math.exp %155 : vector<8x64xf32>
    %cst_54 = arith.constant 1.000000e+00 : f32
    %157 = vector.broadcast %cst_54 : f32 to vector<8x64xf32>
    %158 = arith.addf %157, %156 : vector<8x64xf32>
    %159 = arith.divf %157, %158 : vector<8x64xf32>
    %160 = vector.extract_strided_slice %153 {offsets = [0, 64], sizes = [8, 64], strides = [1, 1]} : vector<8x256xf32> to vector<8x64xf32>
    %161 = arith.negf %160 : vector<8x64xf32>
    %162 = math.exp %161 : vector<8x64xf32>
    %cst_55 = arith.constant 1.000000e+00 : f32
    %163 = vector.broadcast %cst_55 : f32 to vector<8x64xf32>
    %164 = arith.addf %163, %162 : vector<8x64xf32>
    %165 = arith.divf %163, %164 : vector<8x64xf32>
    %166 = vector.extract_strided_slice %153 {offsets = [0, 128], sizes = [8, 64], strides = [1, 1]} : vector<8x256xf32> to vector<8x64xf32>
    %167 = math.tanh %166 : vector<8x64xf32>
    %168 = vector.extract_strided_slice %153 {offsets = [0, 192], sizes = [8, 64], strides = [1, 1]} : vector<8x256xf32> to vector<8x64xf32>
    %169 = arith.negf %168 : vector<8x64xf32>
    %170 = math.exp %169 : vector<8x64xf32>
    %cst_56 = arith.constant 1.000000e+00 : f32
    %171 = vector.broadcast %cst_56 : f32 to vector<8x64xf32>
    %172 = arith.addf %171, %170 : vector<8x64xf32>
    %173 = arith.divf %171, %172 : vector<8x64xf32>
    %174 = arith.mulf %165, %111 : vector<8x64xf32>
    %175 = arith.mulf %159, %167 : vector<8x64xf32>
    %176 = arith.addf %174, %175 : vector<8x64xf32>
    %177 = math.tanh %176 : vector<8x64xf32>
    %178 = arith.mulf %173, %177 : vector<8x64xf32>
    %179 = arith.truncf %178 : vector<8x64xf32> to vector<8x64xbf16>
    %c0_57 = arith.constant 0 : index
    %c0_58 = arith.constant 0 : index
    %180 = vector.load %arg5[%c0_57, %c0_58] : memref<64x256xbf16, #tpu.memory_space<vmem>>, vector<64x256xbf16>
    %cst_59 = arith.constant dense<0.000000e+00> : vector<8x256xf32>
    %181 = tpu.matmul %179, %180, %cst_59 {dimension_numbers = #tpu.dot_dimension_numbers<[1], [0], [0], [1], [0, 0, 1, 1], [], []>} : vector<8x64xbf16>, vector<64x256xbf16>, vector<8x256xf32> -> vector<8x256xf32>
    %182 = arith.addf %147, %181 : vector<8x256xf32>
    %183 = vector.extract_strided_slice %182 {offsets = [0, 0], sizes = [8, 64], strides = [1, 1]} : vector<8x256xf32> to vector<8x64xf32>
    %184 = arith.negf %183 : vector<8x64xf32>
    %185 = math.exp %184 : vector<8x64xf32>
    %cst_60 = arith.constant 1.000000e+00 : f32
    %186 = vector.broadcast %cst_60 : f32 to vector<8x64xf32>
    %187 = arith.addf %186, %185 : vector<8x64xf32>
    %188 = arith.divf %186, %187 : vector<8x64xf32>
    %189 = vector.extract_strided_slice %182 {offsets = [0, 64], sizes = [8, 64], strides = [1, 1]} : vector<8x256xf32> to vector<8x64xf32>
    %190 = arith.negf %189 : vector<8x64xf32>
    %191 = math.exp %190 : vector<8x64xf32>
    %cst_61 = arith.constant 1.000000e+00 : f32
    %192 = vector.broadcast %cst_61 : f32 to vector<8x64xf32>
    %193 = arith.addf %192, %191 : vector<8x64xf32>
    %194 = arith.divf %192, %193 : vector<8x64xf32>
    %195 = vector.extract_strided_slice %182 {offsets = [0, 128], sizes = [8, 64], strides = [1, 1]} : vector<8x256xf32> to vector<8x64xf32>
    %196 = math.tanh %195 : vector<8x64xf32>
    %197 = vector.extract_strided_slice %182 {offsets = [0, 192], sizes = [8, 64], strides = [1, 1]} : vector<8x256xf32> to vector<8x64xf32>
    %198 = arith.negf %197 : vector<8x64xf32>
    %199 = math.exp %198 : vector<8x64xf32>
    %cst_62 = arith.constant 1.000000e+00 : f32
    %200 = vector.broadcast %cst_62 : f32 to vector<8x64xf32>
    %201 = arith.addf %200, %199 : vector<8x64xf32>
    %202 = arith.divf %200, %201 : vector<8x64xf32>
    %203 = arith.mulf %194, %140 : vector<8x64xf32>
    %204 = arith.mulf %188, %196 : vector<8x64xf32>
    %205 = arith.addf %203, %204 : vector<8x64xf32>
    %206 = math.tanh %205 : vector<8x64xf32>
    %207 = arith.mulf %202, %206 : vector<8x64xf32>
    %208 = arith.truncf %207 : vector<8x64xf32> to vector<8x64xbf16>
    %c0_63 = arith.constant 0 : index
    %c0_64 = arith.constant 0 : index
    %209 = vector.load %arg6[%c0_63, %c0_64] : memref<64x256xbf16, #tpu.memory_space<vmem>>, vector<64x256xbf16>
    %cst_65 = arith.constant dense<0.000000e+00> : vector<8x256xf32>
    %210 = tpu.matmul %208, %209, %cst_65 {dimension_numbers = #tpu.dot_dimension_numbers<[1], [0], [0], [1], [0, 0, 1, 1], [], []>} : vector<8x64xbf16>, vector<64x256xbf16>, vector<8x256xf32> -> vector<8x256xf32>
    %211 = vector.broadcast %11 : vector<1x256xf32> to vector<8x256xf32>
    %212 = arith.addf %210, %211 : vector<8x256xf32>
    %c3 = arith.constant 3 : index
    %c0_66 = arith.constant 0 : index
    %c0_67 = arith.constant 0 : index
    %213 = vector.load %arg11[%c3, %c0_66, %c0_67] : memref<8x8x256xf32, #tpu.memory_space<vmem>>, vector<1x8x256xf32>
    %214 = vector.shape_cast %213 : vector<1x8x256xf32> to vector<8x256xf32>
    %215 = arith.truncf %178 : vector<8x64xf32> to vector<8x64xbf16>
    %c0_68 = arith.constant 0 : index
    %c0_69 = arith.constant 0 : index
    %216 = vector.load %arg3[%c0_68, %c0_69] : memref<64x256xbf16, #tpu.memory_space<vmem>>, vector<64x256xbf16>
    %cst_70 = arith.constant dense<0.000000e+00> : vector<8x256xf32>
    %217 = tpu.matmul %215, %216, %cst_70 {dimension_numbers = #tpu.dot_dimension_numbers<[1], [0], [0], [1], [0, 0, 1, 1], [], []>} : vector<8x64xbf16>, vector<64x256xbf16>, vector<8x256xf32> -> vector<8x256xf32>
    %218 = arith.addf %214, %217 : vector<8x256xf32>
    %219 = vector.extract_strided_slice %218 {offsets = [0, 0], sizes = [8, 64], strides = [1, 1]} : vector<8x256xf32> to vector<8x64xf32>
    %220 = arith.negf %219 : vector<8x64xf32>
    %221 = math.exp %220 : vector<8x64xf32>
    %cst_71 = arith.constant 1.000000e+00 : f32
    %222 = vector.broadcast %cst_71 : f32 to vector<8x64xf32>
    %223 = arith.addf %222, %221 : vector<8x64xf32>
    %224 = arith.divf %222, %223 : vector<8x64xf32>
    %225 = vector.extract_strided_slice %218 {offsets = [0, 64], sizes = [8, 64], strides = [1, 1]} : vector<8x256xf32> to vector<8x64xf32>
    %226 = arith.negf %225 : vector<8x64xf32>
    %227 = math.exp %226 : vector<8x64xf32>
    %cst_72 = arith.constant 1.000000e+00 : f32
    %228 = vector.broadcast %cst_72 : f32 to vector<8x64xf32>
    %229 = arith.addf %228, %227 : vector<8x64xf32>
    %230 = arith.divf %228, %229 : vector<8x64xf32>
    %231 = vector.extract_strided_slice %218 {offsets = [0, 128], sizes = [8, 64], strides = [1, 1]} : vector<8x256xf32> to vector<8x64xf32>
    %232 = math.tanh %231 : vector<8x64xf32>
    %233 = vector.extract_strided_slice %218 {offsets = [0, 192], sizes = [8, 64], strides = [1, 1]} : vector<8x256xf32> to vector<8x64xf32>
    %234 = arith.negf %233 : vector<8x64xf32>
    %235 = math.exp %234 : vector<8x64xf32>
    %cst_73 = arith.constant 1.000000e+00 : f32
    %236 = vector.broadcast %cst_73 : f32 to vector<8x64xf32>
    %237 = arith.addf %236, %235 : vector<8x64xf32>
    %238 = arith.divf %236, %237 : vector<8x64xf32>
    %239 = arith.mulf %230, %176 : vector<8x64xf32>
    %240 = arith.mulf %224, %232 : vector<8x64xf32>
    %241 = arith.addf %239, %240 : vector<8x64xf32>
    %242 = math.tanh %241 : vector<8x64xf32>
    %243 = arith.mulf %238, %242 : vector<8x64xf32>
    %244 = arith.truncf %243 : vector<8x64xf32> to vector<8x64xbf16>
    %c0_74 = arith.constant 0 : index
    %c0_75 = arith.constant 0 : index
    %245 = vector.load %arg5[%c0_74, %c0_75] : memref<64x256xbf16, #tpu.memory_space<vmem>>, vector<64x256xbf16>
    %cst_76 = arith.constant dense<0.000000e+00> : vector<8x256xf32>
    %246 = tpu.matmul %244, %245, %cst_76 {dimension_numbers = #tpu.dot_dimension_numbers<[1], [0], [0], [1], [0, 0, 1, 1], [], []>} : vector<8x64xbf16>, vector<64x256xbf16>, vector<8x256xf32> -> vector<8x256xf32>
    %247 = arith.addf %212, %246 : vector<8x256xf32>
    %248 = vector.extract_strided_slice %247 {offsets = [0, 0], sizes = [8, 64], strides = [1, 1]} : vector<8x256xf32> to vector<8x64xf32>
    %249 = arith.negf %248 : vector<8x64xf32>
    %250 = math.exp %249 : vector<8x64xf32>
    %cst_77 = arith.constant 1.000000e+00 : f32
    %251 = vector.broadcast %cst_77 : f32 to vector<8x64xf32>
    %252 = arith.addf %251, %250 : vector<8x64xf32>
    %253 = arith.divf %251, %252 : vector<8x64xf32>
    %254 = vector.extract_strided_slice %247 {offsets = [0, 64], sizes = [8, 64], strides = [1, 1]} : vector<8x256xf32> to vector<8x64xf32>
    %255 = arith.negf %254 : vector<8x64xf32>
    %256 = math.exp %255 : vector<8x64xf32>
    %cst_78 = arith.constant 1.000000e+00 : f32
    %257 = vector.broadcast %cst_78 : f32 to vector<8x64xf32>
    %258 = arith.addf %257, %256 : vector<8x64xf32>
    %259 = arith.divf %257, %258 : vector<8x64xf32>
    %260 = vector.extract_strided_slice %247 {offsets = [0, 128], sizes = [8, 64], strides = [1, 1]} : vector<8x256xf32> to vector<8x64xf32>
    %261 = math.tanh %260 : vector<8x64xf32>
    %262 = vector.extract_strided_slice %247 {offsets = [0, 192], sizes = [8, 64], strides = [1, 1]} : vector<8x256xf32> to vector<8x64xf32>
    %263 = arith.negf %262 : vector<8x64xf32>
    %264 = math.exp %263 : vector<8x64xf32>
    %cst_79 = arith.constant 1.000000e+00 : f32
    %265 = vector.broadcast %cst_79 : f32 to vector<8x64xf32>
    %266 = arith.addf %265, %264 : vector<8x64xf32>
    %267 = arith.divf %265, %266 : vector<8x64xf32>
    %268 = arith.mulf %259, %205 : vector<8x64xf32>
    %269 = arith.mulf %253, %261 : vector<8x64xf32>
    %270 = arith.addf %268, %269 : vector<8x64xf32>
    %271 = math.tanh %270 : vector<8x64xf32>
    %272 = arith.mulf %267, %271 : vector<8x64xf32>
    %273 = arith.truncf %272 : vector<8x64xf32> to vector<8x64xbf16>
    %c0_80 = arith.constant 0 : index
    %c0_81 = arith.constant 0 : index
    %274 = vector.load %arg6[%c0_80, %c0_81] : memref<64x256xbf16, #tpu.memory_space<vmem>>, vector<64x256xbf16>
    %cst_82 = arith.constant dense<0.000000e+00> : vector<8x256xf32>
    %275 = tpu.matmul %273, %274, %cst_82 {dimension_numbers = #tpu.dot_dimension_numbers<[1], [0], [0], [1], [0, 0, 1, 1], [], []>} : vector<8x64xbf16>, vector<64x256xbf16>, vector<8x256xf32> -> vector<8x256xf32>
    %276 = vector.broadcast %11 : vector<1x256xf32> to vector<8x256xf32>
    %277 = arith.addf %275, %276 : vector<8x256xf32>
    %c4 = arith.constant 4 : index
    %c0_83 = arith.constant 0 : index
    %c0_84 = arith.constant 0 : index
    %278 = vector.load %arg11[%c4, %c0_83, %c0_84] : memref<8x8x256xf32, #tpu.memory_space<vmem>>, vector<1x8x256xf32>
    %279 = vector.shape_cast %278 : vector<1x8x256xf32> to vector<8x256xf32>
    %280 = arith.truncf %243 : vector<8x64xf32> to vector<8x64xbf16>
    %c0_85 = arith.constant 0 : index
    %c0_86 = arith.constant 0 : index
    %281 = vector.load %arg3[%c0_85, %c0_86] : memref<64x256xbf16, #tpu.memory_space<vmem>>, vector<64x256xbf16>
    %cst_87 = arith.constant dense<0.000000e+00> : vector<8x256xf32>
    %282 = tpu.matmul %280, %281, %cst_87 {dimension_numbers = #tpu.dot_dimension_numbers<[1], [0], [0], [1], [0, 0, 1, 1], [], []>} : vector<8x64xbf16>, vector<64x256xbf16>, vector<8x256xf32> -> vector<8x256xf32>
    %283 = arith.addf %279, %282 : vector<8x256xf32>
    %284 = vector.extract_strided_slice %283 {offsets = [0, 0], sizes = [8, 64], strides = [1, 1]} : vector<8x256xf32> to vector<8x64xf32>
    %285 = arith.negf %284 : vector<8x64xf32>
    %286 = math.exp %285 : vector<8x64xf32>
    %cst_88 = arith.constant 1.000000e+00 : f32
    %287 = vector.broadcast %cst_88 : f32 to vector<8x64xf32>
    %288 = arith.addf %287, %286 : vector<8x64xf32>
    %289 = arith.divf %287, %288 : vector<8x64xf32>
    %290 = vector.extract_strided_slice %283 {offsets = [0, 64], sizes = [8, 64], strides = [1, 1]} : vector<8x256xf32> to vector<8x64xf32>
    %291 = arith.negf %290 : vector<8x64xf32>
    %292 = math.exp %291 : vector<8x64xf32>
    %cst_89 = arith.constant 1.000000e+00 : f32
    %293 = vector.broadcast %cst_89 : f32 to vector<8x64xf32>
    %294 = arith.addf %293, %292 : vector<8x64xf32>
    %295 = arith.divf %293, %294 : vector<8x64xf32>
    %296 = vector.extract_strided_slice %283 {offsets = [0, 128], sizes = [8, 64], strides = [1, 1]} : vector<8x256xf32> to vector<8x64xf32>
    %297 = math.tanh %296 : vector<8x64xf32>
    %298 = vector.extract_strided_slice %283 {offsets = [0, 192], sizes = [8, 64], strides = [1, 1]} : vector<8x256xf32> to vector<8x64xf32>
    %299 = arith.negf %298 : vector<8x64xf32>
    %300 = math.exp %299 : vector<8x64xf32>
    %cst_90 = arith.constant 1.000000e+00 : f32
    %301 = vector.broadcast %cst_90 : f32 to vector<8x64xf32>
    %302 = arith.addf %301, %300 : vector<8x64xf32>
    %303 = arith.divf %301, %302 : vector<8x64xf32>
    %304 = arith.mulf %295, %241 : vector<8x64xf32>
    %305 = arith.mulf %289, %297 : vector<8x64xf32>
    %306 = arith.addf %304, %305 : vector<8x64xf32>
    %307 = math.tanh %306 : vector<8x64xf32>
    %308 = arith.mulf %303, %307 : vector<8x64xf32>
    %309 = arith.truncf %308 : vector<8x64xf32> to vector<8x64xbf16>
    %c0_91 = arith.constant 0 : index
    %c0_92 = arith.constant 0 : index
    %310 = vector.load %arg5[%c0_91, %c0_92] : memref<64x256xbf16, #tpu.memory_space<vmem>>, vector<64x256xbf16>
    %cst_93 = arith.constant dense<0.000000e+00> : vector<8x256xf32>
    %311 = tpu.matmul %309, %310, %cst_93 {dimension_numbers = #tpu.dot_dimension_numbers<[1], [0], [0], [1], [0, 0, 1, 1], [], []>} : vector<8x64xbf16>, vector<64x256xbf16>, vector<8x256xf32> -> vector<8x256xf32>
    %312 = arith.addf %277, %311 : vector<8x256xf32>
    %313 = vector.extract_strided_slice %312 {offsets = [0, 0], sizes = [8, 64], strides = [1, 1]} : vector<8x256xf32> to vector<8x64xf32>
    %314 = arith.negf %313 : vector<8x64xf32>
    %315 = math.exp %314 : vector<8x64xf32>
    %cst_94 = arith.constant 1.000000e+00 : f32
    %316 = vector.broadcast %cst_94 : f32 to vector<8x64xf32>
    %317 = arith.addf %316, %315 : vector<8x64xf32>
    %318 = arith.divf %316, %317 : vector<8x64xf32>
    %319 = vector.extract_strided_slice %312 {offsets = [0, 64], sizes = [8, 64], strides = [1, 1]} : vector<8x256xf32> to vector<8x64xf32>
    %320 = arith.negf %319 : vector<8x64xf32>
    %321 = math.exp %320 : vector<8x64xf32>
    %cst_95 = arith.constant 1.000000e+00 : f32
    %322 = vector.broadcast %cst_95 : f32 to vector<8x64xf32>
    %323 = arith.addf %322, %321 : vector<8x64xf32>
    %324 = arith.divf %322, %323 : vector<8x64xf32>
    %325 = vector.extract_strided_slice %312 {offsets = [0, 128], sizes = [8, 64], strides = [1, 1]} : vector<8x256xf32> to vector<8x64xf32>
    %326 = math.tanh %325 : vector<8x64xf32>
    %327 = vector.extract_strided_slice %312 {offsets = [0, 192], sizes = [8, 64], strides = [1, 1]} : vector<8x256xf32> to vector<8x64xf32>
    %328 = arith.negf %327 : vector<8x64xf32>
    %329 = math.exp %328 : vector<8x64xf32>
    %cst_96 = arith.constant 1.000000e+00 : f32
    %330 = vector.broadcast %cst_96 : f32 to vector<8x64xf32>
    %331 = arith.addf %330, %329 : vector<8x64xf32>
    %332 = arith.divf %330, %331 : vector<8x64xf32>
    %333 = arith.mulf %324, %270 : vector<8x64xf32>
    %334 = arith.mulf %318, %326 : vector<8x64xf32>
    %335 = arith.addf %333, %334 : vector<8x64xf32>
    %336 = math.tanh %335 : vector<8x64xf32>
    %337 = arith.mulf %332, %336 : vector<8x64xf32>
    %338 = arith.truncf %337 : vector<8x64xf32> to vector<8x64xbf16>
    %c0_97 = arith.constant 0 : index
    %c0_98 = arith.constant 0 : index
    %339 = vector.load %arg6[%c0_97, %c0_98] : memref<64x256xbf16, #tpu.memory_space<vmem>>, vector<64x256xbf16>
    %cst_99 = arith.constant dense<0.000000e+00> : vector<8x256xf32>
    %340 = tpu.matmul %338, %339, %cst_99 {dimension_numbers = #tpu.dot_dimension_numbers<[1], [0], [0], [1], [0, 0, 1, 1], [], []>} : vector<8x64xbf16>, vector<64x256xbf16>, vector<8x256xf32> -> vector<8x256xf32>
    %341 = vector.broadcast %11 : vector<1x256xf32> to vector<8x256xf32>
    %342 = arith.addf %340, %341 : vector<8x256xf32>
    %c5 = arith.constant 5 : index
    %c0_100 = arith.constant 0 : index
    %c0_101 = arith.constant 0 : index
    %343 = vector.load %arg11[%c5, %c0_100, %c0_101] : memref<8x8x256xf32, #tpu.memory_space<vmem>>, vector<1x8x256xf32>
    %344 = vector.shape_cast %343 : vector<1x8x256xf32> to vector<8x256xf32>
    %345 = arith.truncf %308 : vector<8x64xf32> to vector<8x64xbf16>
    %c0_102 = arith.constant 0 : index
    %c0_103 = arith.constant 0 : index
    %346 = vector.load %arg3[%c0_102, %c0_103] : memref<64x256xbf16, #tpu.memory_space<vmem>>, vector<64x256xbf16>
    %cst_104 = arith.constant dense<0.000000e+00> : vector<8x256xf32>
    %347 = tpu.matmul %345, %346, %cst_104 {dimension_numbers = #tpu.dot_dimension_numbers<[1], [0], [0], [1], [0, 0, 1, 1], [], []>} : vector<8x64xbf16>, vector<64x256xbf16>, vector<8x256xf32> -> vector<8x256xf32>
    %348 = arith.addf %344, %347 : vector<8x256xf32>
    %349 = vector.extract_strided_slice %348 {offsets = [0, 0], sizes = [8, 64], strides = [1, 1]} : vector<8x256xf32> to vector<8x64xf32>
    %350 = arith.negf %349 : vector<8x64xf32>
    %351 = math.exp %350 : vector<8x64xf32>
    %cst_105 = arith.constant 1.000000e+00 : f32
    %352 = vector.broadcast %cst_105 : f32 to vector<8x64xf32>
    %353 = arith.addf %352, %351 : vector<8x64xf32>
    %354 = arith.divf %352, %353 : vector<8x64xf32>
    %355 = vector.extract_strided_slice %348 {offsets = [0, 64], sizes = [8, 64], strides = [1, 1]} : vector<8x256xf32> to vector<8x64xf32>
    %356 = arith.negf %355 : vector<8x64xf32>
    %357 = math.exp %356 : vector<8x64xf32>
    %cst_106 = arith.constant 1.000000e+00 : f32
    %358 = vector.broadcast %cst_106 : f32 to vector<8x64xf32>
    %359 = arith.addf %358, %357 : vector<8x64xf32>
    %360 = arith.divf %358, %359 : vector<8x64xf32>
    %361 = vector.extract_strided_slice %348 {offsets = [0, 128], sizes = [8, 64], strides = [1, 1]} : vector<8x256xf32> to vector<8x64xf32>
    %362 = math.tanh %361 : vector<8x64xf32>
    %363 = vector.extract_strided_slice %348 {offsets = [0, 192], sizes = [8, 64], strides = [1, 1]} : vector<8x256xf32> to vector<8x64xf32>
    %364 = arith.negf %363 : vector<8x64xf32>
    %365 = math.exp %364 : vector<8x64xf32>
    %cst_107 = arith.constant 1.000000e+00 : f32
    %366 = vector.broadcast %cst_107 : f32 to vector<8x64xf32>
    %367 = arith.addf %366, %365 : vector<8x64xf32>
    %368 = arith.divf %366, %367 : vector<8x64xf32>
    %369 = arith.mulf %360, %306 : vector<8x64xf32>
    %370 = arith.mulf %354, %362 : vector<8x64xf32>
    %371 = arith.addf %369, %370 : vector<8x64xf32>
    %372 = math.tanh %371 : vector<8x64xf32>
    %373 = arith.mulf %368, %372 : vector<8x64xf32>
    %374 = arith.truncf %373 : vector<8x64xf32> to vector<8x64xbf16>
    %c0_108 = arith.constant 0 : index
    %c0_109 = arith.constant 0 : index
    %375 = vector.load %arg5[%c0_108, %c0_109] : memref<64x256xbf16, #tpu.memory_space<vmem>>, vector<64x256xbf16>
    %cst_110 = arith.constant dense<0.000000e+00> : vector<8x256xf32>
    %376 = tpu.matmul %374, %375, %cst_110 {dimension_numbers = #tpu.dot_dimension_numbers<[1], [0], [0], [1], [0, 0, 1, 1], [], []>} : vector<8x64xbf16>, vector<64x256xbf16>, vector<8x256xf32> -> vector<8x256xf32>
    %377 = arith.addf %342, %376 : vector<8x256xf32>
    %378 = vector.extract_strided_slice %377 {offsets = [0, 0], sizes = [8, 64], strides = [1, 1]} : vector<8x256xf32> to vector<8x64xf32>
    %379 = arith.negf %378 : vector<8x64xf32>
    %380 = math.exp %379 : vector<8x64xf32>
    %cst_111 = arith.constant 1.000000e+00 : f32
    %381 = vector.broadcast %cst_111 : f32 to vector<8x64xf32>
    %382 = arith.addf %381, %380 : vector<8x64xf32>
    %383 = arith.divf %381, %382 : vector<8x64xf32>
    %384 = vector.extract_strided_slice %377 {offsets = [0, 64], sizes = [8, 64], strides = [1, 1]} : vector<8x256xf32> to vector<8x64xf32>
    %385 = arith.negf %384 : vector<8x64xf32>
    %386 = math.exp %385 : vector<8x64xf32>
    %cst_112 = arith.constant 1.000000e+00 : f32
    %387 = vector.broadcast %cst_112 : f32 to vector<8x64xf32>
    %388 = arith.addf %387, %386 : vector<8x64xf32>
    %389 = arith.divf %387, %388 : vector<8x64xf32>
    %390 = vector.extract_strided_slice %377 {offsets = [0, 128], sizes = [8, 64], strides = [1, 1]} : vector<8x256xf32> to vector<8x64xf32>
    %391 = math.tanh %390 : vector<8x64xf32>
    %392 = vector.extract_strided_slice %377 {offsets = [0, 192], sizes = [8, 64], strides = [1, 1]} : vector<8x256xf32> to vector<8x64xf32>
    %393 = arith.negf %392 : vector<8x64xf32>
    %394 = math.exp %393 : vector<8x64xf32>
    %cst_113 = arith.constant 1.000000e+00 : f32
    %395 = vector.broadcast %cst_113 : f32 to vector<8x64xf32>
    %396 = arith.addf %395, %394 : vector<8x64xf32>
    %397 = arith.divf %395, %396 : vector<8x64xf32>
    %398 = arith.mulf %389, %335 : vector<8x64xf32>
    %399 = arith.mulf %383, %391 : vector<8x64xf32>
    %400 = arith.addf %398, %399 : vector<8x64xf32>
    %401 = math.tanh %400 : vector<8x64xf32>
    %402 = arith.mulf %397, %401 : vector<8x64xf32>
    %403 = arith.truncf %402 : vector<8x64xf32> to vector<8x64xbf16>
    %c0_114 = arith.constant 0 : index
    %c0_115 = arith.constant 0 : index
    %404 = vector.load %arg6[%c0_114, %c0_115] : memref<64x256xbf16, #tpu.memory_space<vmem>>, vector<64x256xbf16>
    %cst_116 = arith.constant dense<0.000000e+00> : vector<8x256xf32>
    %405 = tpu.matmul %403, %404, %cst_116 {dimension_numbers = #tpu.dot_dimension_numbers<[1], [0], [0], [1], [0, 0, 1, 1], [], []>} : vector<8x64xbf16>, vector<64x256xbf16>, vector<8x256xf32> -> vector<8x256xf32>
    %406 = vector.broadcast %11 : vector<1x256xf32> to vector<8x256xf32>
    %407 = arith.addf %405, %406 : vector<8x256xf32>
    %c6 = arith.constant 6 : index
    %c0_117 = arith.constant 0 : index
    %c0_118 = arith.constant 0 : index
    %408 = vector.load %arg11[%c6, %c0_117, %c0_118] : memref<8x8x256xf32, #tpu.memory_space<vmem>>, vector<1x8x256xf32>
    %409 = vector.shape_cast %408 : vector<1x8x256xf32> to vector<8x256xf32>
    %410 = arith.truncf %373 : vector<8x64xf32> to vector<8x64xbf16>
    %c0_119 = arith.constant 0 : index
    %c0_120 = arith.constant 0 : index
    %411 = vector.load %arg3[%c0_119, %c0_120] : memref<64x256xbf16, #tpu.memory_space<vmem>>, vector<64x256xbf16>
    %cst_121 = arith.constant dense<0.000000e+00> : vector<8x256xf32>
    %412 = tpu.matmul %410, %411, %cst_121 {dimension_numbers = #tpu.dot_dimension_numbers<[1], [0], [0], [1], [0, 0, 1, 1], [], []>} : vector<8x64xbf16>, vector<64x256xbf16>, vector<8x256xf32> -> vector<8x256xf32>
    %413 = arith.addf %409, %412 : vector<8x256xf32>
    %414 = vector.extract_strided_slice %413 {offsets = [0, 0], sizes = [8, 64], strides = [1, 1]} : vector<8x256xf32> to vector<8x64xf32>
    %415 = arith.negf %414 : vector<8x64xf32>
    %416 = math.exp %415 : vector<8x64xf32>
    %cst_122 = arith.constant 1.000000e+00 : f32
    %417 = vector.broadcast %cst_122 : f32 to vector<8x64xf32>
    %418 = arith.addf %417, %416 : vector<8x64xf32>
    %419 = arith.divf %417, %418 : vector<8x64xf32>
    %420 = vector.extract_strided_slice %413 {offsets = [0, 64], sizes = [8, 64], strides = [1, 1]} : vector<8x256xf32> to vector<8x64xf32>
    %421 = arith.negf %420 : vector<8x64xf32>
    %422 = math.exp %421 : vector<8x64xf32>
    %cst_123 = arith.constant 1.000000e+00 : f32
    %423 = vector.broadcast %cst_123 : f32 to vector<8x64xf32>
    %424 = arith.addf %423, %422 : vector<8x64xf32>
    %425 = arith.divf %423, %424 : vector<8x64xf32>
    %426 = vector.extract_strided_slice %413 {offsets = [0, 128], sizes = [8, 64], strides = [1, 1]} : vector<8x256xf32> to vector<8x64xf32>
    %427 = math.tanh %426 : vector<8x64xf32>
    %428 = vector.extract_strided_slice %413 {offsets = [0, 192], sizes = [8, 64], strides = [1, 1]} : vector<8x256xf32> to vector<8x64xf32>
    %429 = arith.negf %428 : vector<8x64xf32>
    %430 = math.exp %429 : vector<8x64xf32>
    %cst_124 = arith.constant 1.000000e+00 : f32
    %431 = vector.broadcast %cst_124 : f32 to vector<8x64xf32>
    %432 = arith.addf %431, %430 : vector<8x64xf32>
    %433 = arith.divf %431, %432 : vector<8x64xf32>
    %434 = arith.mulf %425, %371 : vector<8x64xf32>
    %435 = arith.mulf %419, %427 : vector<8x64xf32>
    %436 = arith.addf %434, %435 : vector<8x64xf32>
    %437 = math.tanh %436 : vector<8x64xf32>
    %438 = arith.mulf %433, %437 : vector<8x64xf32>
    %439 = arith.truncf %438 : vector<8x64xf32> to vector<8x64xbf16>
    %c0_125 = arith.constant 0 : index
    %c0_126 = arith.constant 0 : index
    %440 = vector.load %arg5[%c0_125, %c0_126] : memref<64x256xbf16, #tpu.memory_space<vmem>>, vector<64x256xbf16>
    %cst_127 = arith.constant dense<0.000000e+00> : vector<8x256xf32>
    %441 = tpu.matmul %439, %440, %cst_127 {dimension_numbers = #tpu.dot_dimension_numbers<[1], [0], [0], [1], [0, 0, 1, 1], [], []>} : vector<8x64xbf16>, vector<64x256xbf16>, vector<8x256xf32> -> vector<8x256xf32>
    %442 = arith.addf %407, %441 : vector<8x256xf32>
    %443 = vector.extract_strided_slice %442 {offsets = [0, 0], sizes = [8, 64], strides = [1, 1]} : vector<8x256xf32> to vector<8x64xf32>
    %444 = arith.negf %443 : vector<8x64xf32>
    %445 = math.exp %444 : vector<8x64xf32>
    %cst_128 = arith.constant 1.000000e+00 : f32
    %446 = vector.broadcast %cst_128 : f32 to vector<8x64xf32>
    %447 = arith.addf %446, %445 : vector<8x64xf32>
    %448 = arith.divf %446, %447 : vector<8x64xf32>
    %449 = vector.extract_strided_slice %442 {offsets = [0, 64], sizes = [8, 64], strides = [1, 1]} : vector<8x256xf32> to vector<8x64xf32>
    %450 = arith.negf %449 : vector<8x64xf32>
    %451 = math.exp %450 : vector<8x64xf32>
    %cst_129 = arith.constant 1.000000e+00 : f32
    %452 = vector.broadcast %cst_129 : f32 to vector<8x64xf32>
    %453 = arith.addf %452, %451 : vector<8x64xf32>
    %454 = arith.divf %452, %453 : vector<8x64xf32>
    %455 = vector.extract_strided_slice %442 {offsets = [0, 128], sizes = [8, 64], strides = [1, 1]} : vector<8x256xf32> to vector<8x64xf32>
    %456 = math.tanh %455 : vector<8x64xf32>
    %457 = vector.extract_strided_slice %442 {offsets = [0, 192], sizes = [8, 64], strides = [1, 1]} : vector<8x256xf32> to vector<8x64xf32>
    %458 = arith.negf %457 : vector<8x64xf32>
    %459 = math.exp %458 : vector<8x64xf32>
    %cst_130 = arith.constant 1.000000e+00 : f32
    %460 = vector.broadcast %cst_130 : f32 to vector<8x64xf32>
    %461 = arith.addf %460, %459 : vector<8x64xf32>
    %462 = arith.divf %460, %461 : vector<8x64xf32>
    %463 = arith.mulf %454, %400 : vector<8x64xf32>
    %464 = arith.mulf %448, %456 : vector<8x64xf32>
    %465 = arith.addf %463, %464 : vector<8x64xf32>
    %466 = math.tanh %465 : vector<8x64xf32>
    %467 = arith.mulf %462, %466 : vector<8x64xf32>
    %468 = arith.truncf %467 : vector<8x64xf32> to vector<8x64xbf16>
    %c0_131 = arith.constant 0 : index
    %c0_132 = arith.constant 0 : index
    %469 = vector.load %arg6[%c0_131, %c0_132] : memref<64x256xbf16, #tpu.memory_space<vmem>>, vector<64x256xbf16>
    %cst_133 = arith.constant dense<0.000000e+00> : vector<8x256xf32>
    %470 = tpu.matmul %468, %469, %cst_133 {dimension_numbers = #tpu.dot_dimension_numbers<[1], [0], [0], [1], [0, 0, 1, 1], [], []>} : vector<8x64xbf16>, vector<64x256xbf16>, vector<8x256xf32> -> vector<8x256xf32>
    %471 = vector.broadcast %11 : vector<1x256xf32> to vector<8x256xf32>
    %472 = arith.addf %470, %471 : vector<8x256xf32>
    %c7 = arith.constant 7 : index
    %c0_134 = arith.constant 0 : index
    %c0_135 = arith.constant 0 : index
    %473 = vector.load %arg11[%c7, %c0_134, %c0_135] : memref<8x8x256xf32, #tpu.memory_space<vmem>>, vector<1x8x256xf32>
    %474 = vector.shape_cast %473 : vector<1x8x256xf32> to vector<8x256xf32>
    %475 = arith.truncf %438 : vector<8x64xf32> to vector<8x64xbf16>
    %c0_136 = arith.constant 0 : index
    %c0_137 = arith.constant 0 : index
    %476 = vector.load %arg3[%c0_136, %c0_137] : memref<64x256xbf16, #tpu.memory_space<vmem>>, vector<64x256xbf16>
    %cst_138 = arith.constant dense<0.000000e+00> : vector<8x256xf32>
    %477 = tpu.matmul %475, %476, %cst_138 {dimension_numbers = #tpu.dot_dimension_numbers<[1], [0], [0], [1], [0, 0, 1, 1], [], []>} : vector<8x64xbf16>, vector<64x256xbf16>, vector<8x256xf32> -> vector<8x256xf32>
    %478 = arith.addf %474, %477 : vector<8x256xf32>
    %479 = vector.extract_strided_slice %478 {offsets = [0, 0], sizes = [8, 64], strides = [1, 1]} : vector<8x256xf32> to vector<8x64xf32>
    %480 = arith.negf %479 : vector<8x64xf32>
    %481 = math.exp %480 : vector<8x64xf32>
    %cst_139 = arith.constant 1.000000e+00 : f32
    %482 = vector.broadcast %cst_139 : f32 to vector<8x64xf32>
    %483 = arith.addf %482, %481 : vector<8x64xf32>
    %484 = arith.divf %482, %483 : vector<8x64xf32>
    %485 = vector.extract_strided_slice %478 {offsets = [0, 64], sizes = [8, 64], strides = [1, 1]} : vector<8x256xf32> to vector<8x64xf32>
    %486 = arith.negf %485 : vector<8x64xf32>
    %487 = math.exp %486 : vector<8x64xf32>
    %cst_140 = arith.constant 1.000000e+00 : f32
    %488 = vector.broadcast %cst_140 : f32 to vector<8x64xf32>
    %489 = arith.addf %488, %487 : vector<8x64xf32>
    %490 = arith.divf %488, %489 : vector<8x64xf32>
    %491 = vector.extract_strided_slice %478 {offsets = [0, 128], sizes = [8, 64], strides = [1, 1]} : vector<8x256xf32> to vector<8x64xf32>
    %492 = math.tanh %491 : vector<8x64xf32>
    %493 = vector.extract_strided_slice %478 {offsets = [0, 192], sizes = [8, 64], strides = [1, 1]} : vector<8x256xf32> to vector<8x64xf32>
    %494 = arith.negf %493 : vector<8x64xf32>
    %495 = math.exp %494 : vector<8x64xf32>
    %cst_141 = arith.constant 1.000000e+00 : f32
    %496 = vector.broadcast %cst_141 : f32 to vector<8x64xf32>
    %497 = arith.addf %496, %495 : vector<8x64xf32>
    %498 = arith.divf %496, %497 : vector<8x64xf32>
    %499 = arith.mulf %490, %436 : vector<8x64xf32>
    %500 = arith.mulf %484, %492 : vector<8x64xf32>
    %501 = arith.addf %499, %500 : vector<8x64xf32>
    %502 = math.tanh %501 : vector<8x64xf32>
    %503 = arith.mulf %498, %502 : vector<8x64xf32>
    %504 = arith.truncf %503 : vector<8x64xf32> to vector<8x64xbf16>
    %c0_142 = arith.constant 0 : index
    %c0_143 = arith.constant 0 : index
    %505 = vector.load %arg5[%c0_142, %c0_143] : memref<64x256xbf16, #tpu.memory_space<vmem>>, vector<64x256xbf16>
    %cst_144 = arith.constant dense<0.000000e+00> : vector<8x256xf32>
    %506 = tpu.matmul %504, %505, %cst_144 {dimension_numbers = #tpu.dot_dimension_numbers<[1], [0], [0], [1], [0, 0, 1, 1], [], []>} : vector<8x64xbf16>, vector<64x256xbf16>, vector<8x256xf32> -> vector<8x256xf32>
    %507 = arith.addf %472, %506 : vector<8x256xf32>
    %508 = vector.extract_strided_slice %507 {offsets = [0, 0], sizes = [8, 64], strides = [1, 1]} : vector<8x256xf32> to vector<8x64xf32>
    %509 = arith.negf %508 : vector<8x64xf32>
    %510 = math.exp %509 : vector<8x64xf32>
    %cst_145 = arith.constant 1.000000e+00 : f32
    %511 = vector.broadcast %cst_145 : f32 to vector<8x64xf32>
    %512 = arith.addf %511, %510 : vector<8x64xf32>
    %513 = arith.divf %511, %512 : vector<8x64xf32>
    %514 = vector.extract_strided_slice %507 {offsets = [0, 64], sizes = [8, 64], strides = [1, 1]} : vector<8x256xf32> to vector<8x64xf32>
    %515 = arith.negf %514 : vector<8x64xf32>
    %516 = math.exp %515 : vector<8x64xf32>
    %cst_146 = arith.constant 1.000000e+00 : f32
    %517 = vector.broadcast %cst_146 : f32 to vector<8x64xf32>
    %518 = arith.addf %517, %516 : vector<8x64xf32>
    %519 = arith.divf %517, %518 : vector<8x64xf32>
    %520 = vector.extract_strided_slice %507 {offsets = [0, 128], sizes = [8, 64], strides = [1, 1]} : vector<8x256xf32> to vector<8x64xf32>
    %521 = math.tanh %520 : vector<8x64xf32>
    %522 = vector.extract_strided_slice %507 {offsets = [0, 192], sizes = [8, 64], strides = [1, 1]} : vector<8x256xf32> to vector<8x64xf32>
    %523 = arith.negf %522 : vector<8x64xf32>
    %524 = math.exp %523 : vector<8x64xf32>
    %cst_147 = arith.constant 1.000000e+00 : f32
    %525 = vector.broadcast %cst_147 : f32 to vector<8x64xf32>
    %526 = arith.addf %525, %524 : vector<8x64xf32>
    %527 = arith.divf %525, %526 : vector<8x64xf32>
    %528 = arith.mulf %519, %465 : vector<8x64xf32>
    %529 = arith.mulf %513, %521 : vector<8x64xf32>
    %530 = arith.addf %528, %529 : vector<8x64xf32>
    %531 = math.tanh %530 : vector<8x64xf32>
    %532 = arith.mulf %527, %531 : vector<8x64xf32>
    %c0_148 = arith.constant 0 : index
    %c0_149 = arith.constant 0 : index
    %533 = vector.load %arg8[%c0_148, %c0_149] : memref<64x128xf32, #tpu.memory_space<vmem>>, vector<64x128xf32>
    %cst_150 = arith.constant dense<0.000000e+00> : vector<8x128xf32>
    %534 = tpu.matmul %532, %533, %cst_150 {dimension_numbers = #tpu.dot_dimension_numbers<[1], [0], [0], [1], [0, 0, 1, 1], [], []>} : vector<8x64xf32>, vector<64x128xf32>, vector<8x128xf32> -> vector<8x128xf32>
    %c0_151 = arith.constant 0 : index
    %c0_152 = arith.constant 0 : index
    %535 = vector.load %arg9[%c0_151, %c0_152] : memref<1x128xf32, #tpu.memory_space<vmem>>, vector<1x128xf32>
    %536 = vector.broadcast %535 : vector<1x128xf32> to vector<8x128xf32>
    %537 = arith.addf %534, %536 : vector<8x128xf32>
    %c0_153 = arith.constant 0 : index
    %c0_154 = arith.constant 0 : index
    %538 = vector.load %arg10[%c0_153, %c0_154] : memref<8x128xf32, #tpu.memory_space<vmem>>, vector<8x128xf32>
    tpu.vector_store %arg10[%c0_153, %c0_154], %537 {strides = array<i32>} : memref<8x128xf32, #tpu.memory_space<vmem>>, vector<8x128xf32>,
    return
  }
  func.func @transform_0(%arg0: i32) -> (i32, i32, i32) {
    %c0_i32 = arith.constant 0 : i32
    %c0_i32_0 = arith.constant 0 : i32
    %c0_i32_1 = arith.constant 0 : i32
    %c0_i32_2 = arith.constant 0 : i32
    return %c0_i32, %c0_i32_0, %c0_i32_1 : i32, i32, i32
  }
  func.func @transform_1(%arg0: i32) -> (i32, i32) {
    %c0_i32 = arith.constant 0 : i32
    %c0_i32_0 = arith.constant 0 : i32
    %c0_i32_1 = arith.constant 0 : i32
    return %c0_i32, %c0_i32_0 : i32, i32
  }
  func.func @transform_2(%arg0: i32) -> (i32, i32) {
    %c0_i32 = arith.constant 0 : i32
    %c0_i32_0 = arith.constant 0 : i32
    %c0_i32_1 = arith.constant 0 : i32
    return %c0_i32, %c0_i32_0 : i32, i32
  }
  func.func @transform_3(%arg0: i32) -> (i32, i32) {
    %c0_i32 = arith.constant 0 : i32
    %c0_i32_0 = arith.constant 0 : i32
    %c0_i32_1 = arith.constant 0 : i32
    return %c0_i32, %c0_i32_0 : i32, i32
  }
  func.func @transform_4(%arg0: i32) -> (i32, i32) {
    %c0_i32 = arith.constant 0 : i32
    %c0_i32_0 = arith.constant 0 : i32
    %c0_i32_1 = arith.constant 0 : i32
    return %c0_i32, %c0_i32_0 : i32, i32
  }
  func.func @transform_5(%arg0: i32) -> (i32, i32) {
    %c0_i32 = arith.constant 0 : i32
    %c0_i32_0 = arith.constant 0 : i32
    %c0_i32_1 = arith.constant 0 : i32
    return %c0_i32, %c0_i32_0 : i32, i32
  }
  func.func @transform_6(%arg0: i32) -> (i32, i32) {
    %c0_i32 = arith.constant 0 : i32
    %c0_i32_0 = arith.constant 0 : i32
    %c0_i32_1 = arith.constant 0 : i32
    return %c0_i32, %c0_i32_0 : i32, i32
  }
  func.func @transform_7(%arg0: i32) -> (i32, i32) {
    %c0_i32 = arith.constant 0 : i32
    %c0_i32_0 = arith.constant 0 : i32
    %c0_i32_1 = arith.constant 0 : i32
    return %c0_i32, %c0_i32_0 : i32, i32
  }
  func.func @transform_8(%arg0: i32) -> (i32, i32) {
    %c0_i32 = arith.constant 0 : i32
    %c0_i32_0 = arith.constant 0 : i32
    %c0_i32_1 = arith.constant 0 : i32
    return %c0_i32, %c0_i32_0 : i32, i32
  }
  func.func @transform_9(%arg0: i32) -> (i32, i32) {
    %c0_i32 = arith.constant 0 : i32
    %c0_i32_0 = arith.constant 0 : i32
    %c0_i32_1 = arith.constant 0 : i32
    return %c0_i32, %c0_i32_0 : i32, i32
  }
}

</mosaic_0001>

<llo_original>
// kernel: tpu_custom_call.1
$region0: #{tpu_custom_call.1}
  #allocation0 [shape = 'u32[]', space=smem, size = 0x4, offset = 0x4, fixed_abs, tag = 'smem constant byte address 0x4 - core index']
  #allocation1 [shape = 'u32[144,128]{1,0:T(1,128)}', space=vmem, size = 0x12000, scoped, tag = 'internal scratch']
  #allocation2 [shape = 'f32[8,8,256]{2,1,0:T(8,128)}', space=vmem, size = 0x10000, scoped, tag = 'scratch operand']
  %s0 = inlined_call_operand.vmem [shape: f32[8,8,1], index: 0, kind: input, shape index: {}]
  %s1 = inlined_call_operand.vmem [shape: f32[1,256], index: 1, kind: input, shape index: {}]
  %s2 = inlined_call_operand.vmem [shape: bf16[64,256], index: 2, kind: input, shape index: {}]
  %s3 = inlined_call_operand.vmem [shape: f32[1,256], index: 3, kind: input, shape index: {}]
  %s4 = inlined_call_operand.hbm [shape: bf16[64,256], index: 4, kind: input, shape index: {}]
  %s5 = inlined_call_operand.hbm [shape: bf16[64,256], index: 5, kind: input, shape index: {}]
  %s6 = inlined_call_operand.vmem [shape: f32[1,256], index: 6, kind: input, shape index: {}]
  %s7 = inlined_call_operand.hbm [shape: f32[64,128], index: 7, kind: input, shape index: {}]
  %s8 = inlined_call_operand.vmem [shape: f32[1,128], index: 8, kind: input, shape index: {}]
  %s9 = inlined_call_operand.hbm [shape: f32[8,128], index: 9, kind: output, shape index: {}]
  %s10 = sld [smem:[#allocation0]]
  $region58: #{tpu_custom_call.1} parent=0
    _
  %s12 = ssub.s32 1, %s10
  %s13 = scalar_select 0, %s12, %s10
  $region1: #{tpu_custom_call.1} parent=0
    #allocation3 [shape = 'u8[32768]{0}', space=vmem, size = 0x8000, scoped, tag = 'input window, operand 4, single buffered']
    #allocation4 [shape = 's32[1]{0}', space=sflag, size = 0x4, scoped, tag = 'scoped memory for tpu_custom_call.1']
    #allocation5 [shape = 's32[1]{0}', space=sflag, size = 0x4, scoped, tag = 'scoped memory for tpu_custom_call.1']
    #allocation6 [shape = 'u8[32768]{0}', space=vmem, size = 0x8000, scoped, tag = 'input window, operand 5, single buffered']
    #allocation7 [shape = 's32[1]{0}', space=sflag, size = 0x4, scoped, tag = 'scoped memory for tpu_custom_call.1']
    #allocation8 [shape = 'u8[32768]{0}', space=vmem, size = 0x8000, scoped, tag = 'input window, operand 7, single buffered']
    #allocation9 [shape = 'u8[4096]{0}', space=vmem, size = 0x1000, scoped, tag = 'output window, operand 0, single buffered']
    %14 = vsyncpa [#allocation4], 0
    %15 = vsyncpa [#allocation7], 0
    %16 = vsyncpa [#allocation5], 0
    // Predicated region
    $region2: #{tpu_custom_call.1} parent=1 // pred_check
      _
    $region3: #{tpu_custom_call.1} parent=1 // pred_check_branch
      %18 = sbr.rel (0) target = $region5
    $region4: #{tpu_custom_call.1} parent=1 // pred_region
      _
    $region5: #{tpu_custom_call.1} parent=1 // pred_fallthru
      _
    // Predicated region
    $region6: #{tpu_custom_call.1} parent=1 // pred_check
      _
    $region7: #{tpu_custom_call.1} parent=1 // pred_check_branch
      %20 = sbr.rel (0) target = $region9
    $region8: #{tpu_custom_call.1} parent=1 // pred_region
      _
    $region9: #{tpu_custom_call.1} parent=1 // pred_fallthru
      _
    // Predicated region
    $region10: #{tpu_custom_call.1} parent=1 // pred_check
      _
    $region11: #{tpu_custom_call.1} parent=1 // pred_check_branch
      %22 = sbr.rel (0) target = $region13
    $region12: #{tpu_custom_call.1} parent=1 // pred_region
      _
    $region13: #{tpu_custom_call.1} parent=1 // pred_fallthru
      _
    // Predicated region
    $region14: #{tpu_custom_call.1} parent=1 // pred_check
      _
    $region15: #{tpu_custom_call.1} parent=1 // pred_check_branch
      %24 = sbr.rel (0) target = $region17
    $region16: #{tpu_custom_call.1} parent=1 // pred_region
      _
    $region17: #{tpu_custom_call.1} parent=1 // pred_fallthru
      _
    // Predicated region
    $region18: #{tpu_custom_call.1} parent=1 // pred_check
      _
    $region19: #{tpu_custom_call.1} parent=1 // pred_check_branch
      %26 = sbr.rel (0) target = $region21
    $region20: #{tpu_custom_call.1} parent=1 // pred_region
      %s28 = ssub.s32 1024, 1024
      %29 = vsyncadd [#allocation4], %s28
      %s30 = sshll.u32 [#allocation3], 4
      %s31 = int_to_ptr.vmem [resolvable:$true] %s30
      %36 = dma.hbm_to_vmem [thread:$0]  %s4, 1024, %s31, [#allocation4], 128, 128, 8
    $region21: #{tpu_custom_call.1} parent=1 // pred_fallthru
      _
    // Predicated region
    $region22: #{tpu_custom_call.1} parent=1 // pred_check
      _
    $region23: #{tpu_custom_call.1} parent=1 // pred_check_branch
      %38 = sbr.rel (0) target = $region25
    $region24: #{tpu_custom_call.1} parent=1 // pred_region
      %s40 = ssub.s32 1024, 1024
      %41 = vsyncadd [#allocation7], %s40
      %s42 = sshll.u32 [#allocation6], 4
      %s43 = int_to_ptr.vmem [resolvable:$true] %s42
      %48 = dma.hbm_to_vmem [thread:$0]  %s5, 1024, %s43, [#allocation7], 128, 128, 8
    $region25: #{tpu_custom_call.1} parent=1 // pred_fallthru
      _
    // Predicated region
    $region26: #{tpu_custom_call.1} parent=1 // pred_check
      _
    $region27: #{tpu_custom_call.1} parent=1 // pred_check_branch
      %50 = sbr.rel (0) target = $region29
    $region28: #{tpu_custom_call.1} parent=1 // pred_region
      _
    $region29: #{tpu_custom_call.1} parent=1 // pred_fallthru
      _
    // Predicated region
    $region30: #{tpu_custom_call.1} parent=1 // pred_check
      _
    $region31: #{tpu_custom_call.1} parent=1 // pred_check_branch
      %52 = sbr.rel (0) target = $region33
    $region32: #{tpu_custom_call.1} parent=1 // pred_region
      %s54 = ssub.s32 1024, 1024
      %55 = vsyncadd [#allocation7], %s54
      %s56 = sshll.u32 [#allocation8], 4
      %s57 = int_to_ptr.vmem [resolvable:$true] %s56
      %62 = dma.hbm_to_vmem [thread:$0]  %s7, 1024, %s57, [#allocation7], 128, 128, 8
    $region33: #{tpu_custom_call.1} parent=1 // pred_fallthru
      _
    // Predicated region
    $region34: #{tpu_custom_call.1} parent=1 // pred_check
      _
    $region35: #{tpu_custom_call.1} parent=1 // pred_check_branch
      %64 = sbr.rel (0) target = $region37
    $region36: #{tpu_custom_call.1} parent=1 // pred_region
      _
    $region37: #{tpu_custom_call.1} parent=1 // pred_fallthru
      _
    // Predicated region
    $region38: #{tpu_custom_call.1} parent=1 // pred_check
      _
    $region39: #{tpu_custom_call.1} parent=1 // pred_check_branch
      %66 = sbr.rel (0) target = $region41
    $region40: #{tpu_custom_call.1} parent=1 // pred_region
      %67 = dma.done [#allocation4], 1024
    $region41: #{tpu_custom_call.1} parent=1 // pred_fallthru
      _
    // Predicated region
    $region42: #{tpu_custom_call.1} parent=1 // pred_check
      _
    $region43: #{tpu_custom_call.1} parent=1 // pred_check_branch
      %69 = sbr.rel (0) target = $region45
    $region44: #{tpu_custom_call.1} parent=1 // pred_region
      %70 = dma.done [#allocation7], 1024
    $region45: #{tpu_custom_call.1} parent=1 // pred_fallthru
      _
    // Predicated region
    $region46: #{tpu_custom_call.1} parent=1 // pred_check
      _
    $region47: #{tpu_custom_call.1} parent=1 // pred_check_branch
      %72 = sbr.rel (0) target = $region49
    $region48: #{tpu_custom_call.1} parent=1 // pred_region
      %73 = dma.done [#allocation7], 1024
    $region49: #{tpu_custom_call.1} parent=1 // pred_fallthru
      _
    %v75 = vld [vmem:[%s0] sm:$0xff]
    %v76 = vld [vmem:[%s0 + $0x8] sm:$0xff]
    %v77 = vld [vmem:[%s0 + $0x10] sm:$0xff]
    %v78 = vld [vmem:[%s0 + $0x18] sm:$0xff]
    %v79 = vld [vmem:[%s0 + $0x20] sm:$0xff]
    %v80 = vld [vmem:[%s0 + $0x28] sm:$0xff]
    %v81 = vld [vmem:[%s0 + $0x30] sm:$0xff]
    %v82 = vld [vmem:[%s0 + $0x38] sm:$0xff]
    %v83 = vld [vmem:[%s1] sm:$0x3]
    %85 = vset.pattern.permute.xlu0 0
    %86 = vperm.xlu0 %85, %v75
    %v87 = vpop.permute.xlu0 %86
    %90 = vset.pattern.permute.xlu0 0
    %91 = vperm.xlu0 %90, %v76
    %v92 = vpop.permute.xlu0 %91
    %95 = vset.pattern.permute.xlu0 0
    %96 = vperm.xlu0 %95, %v77
    %v97 = vpop.permute.xlu0 %96
    %100 = vset.pattern.permute.xlu0 0
    %101 = vperm.xlu0 %100, %v78
    %v102 = vpop.permute.xlu0 %101
    %105 = vset.pattern.permute.xlu0 0
    %106 = vperm.xlu0 %105, %v79
    %v107 = vpop.permute.xlu0 %106
    %110 = vset.pattern.permute.xlu0 0
    %111 = vperm.xlu0 %110, %v80
    %v112 = vpop.permute.xlu0 %111
    %115 = vset.pattern.permute.xlu0 0
    %116 = vperm.xlu0 %115, %v81
    %v117 = vpop.permute.xlu0 %116
    %120 = vset.pattern.permute.xlu0 0
    %121 = vperm.xlu0 %120, %v82
    %v122 = vpop.permute.xlu0 %121
    %v125 = vlaneseq
    %v126 = vshrl.u32 %v125, 7
    %v127 = vsub.s32 0, %v126
    %v128 = vrot.slane %v83, %v127
    %v129 = vlaneseq
    %v130 = vshrl.u32 %v129, 7
    %v131 = vsub.s32 1, %v130
    %v132 = vrot.slane %v83, %v131
    %v135 = vmul.f32 %v87, %v128
    %v136 = vmul.f32 %v87, %v132
    %v137 = vmul.f32 %v92, %v128
    %v138 = vmul.f32 %v92, %v132
    %v139 = vmul.f32 %v97, %v128
    %v140 = vmul.f32 %v97, %v132
    %v141 = vmul.f32 %v102, %v128
    %v142 = vmul.f32 %v102, %v132
    %v143 = vmul.f32 %v107, %v128
    %v144 = vmul.f32 %v107, %v132
    %v145 = vmul.f32 %v112, %v128
    %v146 = vmul.f32 %v112, %v132
    %v147 = vmul.f32 %v117, %v128
    %v148 = vmul.f32 %v117, %v132
    %v149 = vmul.f32 %v122, %v128
    %v150 = vmul.f32 %v122, %v132
    %v151 = vld [vmem:[%s3] sm:$0x3]
    %v153 = vlaneseq
    %v154 = vshrl.u32 %v153, 7
    %v155 = vsub.s32 0, %v154
    %v156 = vrot.slane %v151, %v155
    %v157 = vlaneseq
    %v158 = vshrl.u32 %v157, 7
    %v159 = vsub.s32 1, %v158
    %v160 = vrot.slane %v151, %v159
    %v163 = vadd.f32 %v135, %v156
    %v164 = vadd.f32 %v136, %v160
    %v165 = vadd.f32 %v137, %v156
    %v166 = vadd.f32 %v138, %v160
    %v167 = vadd.f32 %v139, %v156
    %v168 = vadd.f32 %v140, %v160
    %v169 = vadd.f32 %v141, %v156
    %v170 = vadd.f32 %v142, %v160
    %v171 = vadd.f32 %v143, %v156
    %v172 = vadd.f32 %v144, %v160
    %v173 = vadd.f32 %v145, %v156
    %v174 = vadd.f32 %v146, %v160
    %v175 = vadd.f32 %v147, %v156
    %v176 = vadd.f32 %v148, %v160
    %v177 = vadd.f32 %v149, %v156
    %v178 = vadd.f32 %v150, %v160
    %179 = vst [vmem:[#allocation2] sm:$0xff] %v163
    %180 = vst [vmem:[#allocation2 + $0x8] sm:$0xff] %v164
    %181 = vst [vmem:[#allocation2 + $0x10] sm:$0xff] %v165
    %182 = vst [vmem:[#allocation2 + $0x18] sm:$0xff] %v166
    %183 = vst [vmem:[#allocation2 + $0x20] sm:$0xff] %v167
    %184 = vst [vmem:[#allocation2 + $0x28] sm:$0xff] %v168
    %185 = vst [vmem:[#allocation2 + $0x30] sm:$0xff] %v169
    %186 = vst [vmem:[#allocation2 + $0x38] sm:$0xff] %v170
    %187 = vst [vmem:[#allocation2 + $0x40] sm:$0xff] %v171
    %188 = vst [vmem:[#allocation2 + $0x48] sm:$0xff] %v172
    %189 = vst [vmem:[#allocation2 + $0x50] sm:$0xff] %v173
    %190 = vst [vmem:[#allocation2 + $0x58] sm:$0xff] %v174
    %191 = vst [vmem:[#allocation2 + $0x60] sm:$0xff] %v175
    %192 = vst [vmem:[#allocation2 + $0x68] sm:$0xff] %v176
    %193 = vst [vmem:[#allocation2 + $0x70] sm:$0xff] %v177
    %194 = vst [vmem:[#allocation2 + $0x78] sm:$0xff] %v178
    %v195 = vld [vmem:[%s6] sm:$0x3]
    %v196 = vld [vmem:[#allocation6] sm:$0xff]
    %v197 = vld [vmem:[#allocation6 + $0x8] sm:$0xff]
    %v198 = vld [vmem:[#allocation6 + $0x10] sm:$0xff]
    %v199 = vld [vmem:[#allocation6 + $0x18] sm:$0xff]
    %v200 = vld [vmem:[#allocation6 + $0x20] sm:$0xff]
    %v201 = vld [vmem:[#allocation6 + $0x28] sm:$0xff]
    %v202 = vld [vmem:[#allocation6 + $0x30] sm:$0xff]
    %v203 = vld [vmem:[#allocation6 + $0x38] sm:$0xff]
    %v205 = vlaneseq
    %v206 = vshrl.u32 %v205, 7
    %v207 = vsub.s32 0, %v206
    %v208 = vrot.slane %v195, %v207
    %v209 = vlaneseq
    %v210 = vshrl.u32 %v209, 7
    %v211 = vsub.s32 1, %v210
    %v212 = vrot.slane %v195, %v211
    %v223 = vunpack.c.l.b16 %v196
    %v224 = vunpack.c.h.b16 %v196
    %v225 = vunpack.c.l.b16 %v197
    %v226 = vunpack.c.h.b16 %v197
    %v227 = vunpack.c.l.b16 %v198
    %v228 = vunpack.c.h.b16 %v198
    %v229 = vunpack.c.l.b16 %v199
    %v230 = vunpack.c.h.b16 %v199
    %v231 = vunpack.c.l.b16 %v200
    %v232 = vunpack.c.h.b16 %v200
    %v233 = vunpack.c.l.b16 %v201
    %v234 = vunpack.c.h.b16 %v201
    %v235 = vunpack.c.l.b16 %v202
    %v236 = vunpack.c.h.b16 %v202
    %v237 = vunpack.c.l.b16 %v203
    %v238 = vunpack.c.h.b16 %v203
    %v239 = vpack.c.b16 %v225, %v223
    %v240 = vpack.c.b16 %v226, %v224
    %v241 = vpack.c.b16 %v229, %v227
    %v242 = vpack.c.b16 %v230, %v228
    %v243 = vpack.c.b16 %v233, %v231
    %v244 = vpack.c.b16 %v234, %v232
    %v245 = vpack.c.b16 %v237, %v235
    %v246 = vpack.c.b16 %v238, %v236
    %vm255 = vcmask 523264
    %v257 = vsel %vm255, 0, 0
    %259 = vmatprep.subr.bf16.mxu0 %v240
    %260 = vmatpush1.bf16.msra.mxu0 %v239
    %261 = vmatprep.subr.bf16.mxu0 %v242
    %262 = vmatpush1.bf16.msra.mxu0 %v241
    %263 = vmatprep.subr.bf16.mxu0 %v244
    %264 = vmatpush1.bf16.msra.mxu0 %v243
    %265 = vmatprep.subr.bf16.mxu0 %v246
    %266 = vmatpush1.bf16.msra.mxu0 %v245
    %267 = vmatprep.subr.bf16.mxu0 0
    %268 = vmatpush1.bf16.msra.mxu0 0
    %269 = vmatprep.subr.bf16.mxu0 0
    %270 = vmatpush1.bf16.msra.mxu0 0
    %271 = vmatprep.subr.bf16.mxu0 0
    %272 = vmatpush1.bf16.msra.mxu0 0
    %273 = vmatprep.subr.bf16.mxu0 0
    %274 = vmatpush1.bf16.msra.mxu0 0
    %275 = vmatprep.subr.bf16.mxu0 0
    %276 = vmatpush1.bf16.msra.mxu0 0
    %277 = vmatprep.subr.bf16.mxu0 0
    %278 = vmatpush1.bf16.msra.mxu0 0
    %279 = vmatprep.subr.bf16.mxu0 0
    %280 = vmatpush1.bf16.msra.mxu0 0
    %281 = vmatprep.subr.bf16.mxu0 0
    %282 = vmatpush1.bf16.msra.mxu0 0
    %283 = vmatprep.subr.bf16.mxu0 0
    %284 = vmatpush1.bf16.msra.mxu0 0
    %285 = vmatprep.subr.bf16.mxu0 0
    %286 = vmatpush1.bf16.msra.mxu0 0
    %287 = vmatprep.subr.bf16.mxu0 0
    %288 = vmatpush1.bf16.msra.mxu0 0
    %289 = vmatprep.subr.bf16.mxu0 0
    %290 = vmatpush1.bf16.msra.mxu0 0
    %291 = vmatprep.mubr.bf16.mxu0 0
    %292 = vmatmul.mubr.bf16.gmra.mrb[0].mxu0 %v257
    %v293 = vpop.f32.mrb[0].mxu0
    %v294 = vadd.f32 %v208, %v293
    %v295 = vpop.f32.mrb[0].mxu0
    %v296 = vadd.f32 %v212, %v295
    %v297 = vpop.f32.mrb[0].mxu0
    %v298 = vpop.f32.mrb[0].mxu0
    %299 = vdwg.mxu0
    %v300 = vld [vmem:[#allocation2] sm:$0xff]
    %v301 = vld [vmem:[#allocation2 + $0x8] sm:$0xff]
    %v302 = vld [vmem:[%s2] sm:$0xff]
    %v303 = vld [vmem:[%s2 + $0x8] sm:$0xff]
    %v304 = vld [vmem:[%s2 + $0x10] sm:$0xff]
    %v305 = vld [vmem:[%s2 + $0x18] sm:$0xff]
    %v306 = vld [vmem:[%s2 + $0x20] sm:$0xff]
    %v307 = vld [vmem:[%s2 + $0x28] sm:$0xff]
    %v308 = vld [vmem:[%s2 + $0x30] sm:$0xff]
    %v309 = vld [vmem:[%s2 + $0x38] sm:$0xff]
    %v318 = vunpack.c.l.b16 %v302
    %v319 = vunpack.c.h.b16 %v302
    %v320 = vunpack.c.l.b16 %v303
    %v321 = vunpack.c.h.b16 %v303
    %v322 = vunpack.c.l.b16 %v304
    %v323 = vunpack.c.h.b16 %v304
    %v324 = vunpack.c.l.b16 %v305
    %v325 = vunpack.c.h.b16 %v305
    %v326 = vunpack.c.l.b16 %v306
    %v327 = vunpack.c.h.b16 %v306
    %v328 = vunpack.c.l.b16 %v307
    %v329 = vunpack.c.h.b16 %v307
    %v330 = vunpack.c.l.b16 %v308
    %v331 = vunpack.c.h.b16 %v308
    %v332 = vunpack.c.l.b16 %v309
    %v333 = vunpack.c.h.b16 %v309
    %v334 = vpack.c.b16 %v320, %v318
    %v335 = vpack.c.b16 %v321, %v319
    %v336 = vpack.c.b16 %v324, %v322
    %v337 = vpack.c.b16 %v325, %v323
    %v338 = vpack.c.b16 %v328, %v326
    %v339 = vpack.c.b16 %v329, %v327
    %v340 = vpack.c.b16 %v332, %v330
    %v341 = vpack.c.b16 %v333, %v331
    %350 = vmatprep.subr.bf16.mxu0 %v335
    %351 = vmatpush1.bf16.msra.mxu0 %v334
    %352 = vmatprep.subr.bf16.mxu0 %v337
    %353 = vmatpush1.bf16.msra.mxu0 %v336
    %354 = vmatprep.subr.bf16.mxu0 %v339
    %355 = vmatpush1.bf16.msra.mxu0 %v338
    %356 = vmatprep.subr.bf16.mxu0 %v341
    %357 = vmatpush1.bf16.msra.mxu0 %v340
    %358 = vmatprep.subr.bf16.mxu0 0
    %359 = vmatpush1.bf16.msra.mxu0 0
    %360 = vmatprep.subr.bf16.mxu0 0
    %361 = vmatpush1.bf16.msra.mxu0 0
    %362 = vmatprep.subr.bf16.mxu0 0
    %363 = vmatpush1.bf16.msra.mxu0 0
    %364 = vmatprep.subr.bf16.mxu0 0
    %365 = vmatpush1.bf16.msra.mxu0 0
    %366 = vmatprep.subr.bf16.mxu0 0
    %367 = vmatpush1.bf16.msra.mxu0 0
    %368 = vmatprep.subr.bf16.mxu0 0
    %369 = vmatpush1.bf16.msra.mxu0 0
    %370 = vmatprep.subr.bf16.mxu0 0
    %371 = vmatpush1.bf16.msra.mxu0 0
    %372 = vmatprep.subr.bf16.mxu0 0
    %373 = vmatpush1.bf16.msra.mxu0 0
    %374 = vmatprep.subr.bf16.mxu0 0
    %375 = vmatpush1.bf16.msra.mxu0 0
    %376 = vmatprep.subr.bf16.mxu0 0
    %377 = vmatpush1.bf16.msra.mxu0 0
    %378 = vmatprep.subr.bf16.mxu0 0
    %379 = vmatpush1.bf16.msra.mxu0 0
    %380 = vmatprep.subr.bf16.mxu0 0
    %381 = vmatpush1.bf16.msra.mxu0 0
    %382 = vmatprep.mubr.bf16.mxu0 0
    %383 = vmatmul.mubr.bf16.gmra.mrb[0].mxu0 %v257
    %v384 = vpop.f32.mrb[0].mxu0
    %v385 = vadd.f32 0.0, %v384
    %v386 = vpop.f32.mrb[0].mxu0
    %v387 = vadd.f32 0.0, %v386
    %v388 = vpop.f32.mrb[0].mxu0
    %v389 = vpop.f32.mrb[0].mxu0
    %390 = vdwg.mxu0
    %v391 = vadd.f32 %v300, %v385
    %v392 = vadd.f32 %v301, %v387
    %v393 = vxor.u32 %v391, 2147483648
    %v394 = vmul.f32 %v393, 1.442695
    %v395 = vpow.pop %v394
    %v396 = vadd.f32 %v395, 1.0
    %v397 = vrcp.pop %v396
    %v398 = vmul.f32 1.0, %v397
    %v399 = vtanh.pop %v392
    %v400 = vxor.u32 %v392, 2147483648
    %v401 = vmul.f32 %v400, 1.442695
    %v402 = vpow.pop %v401
    %v403 = vadd.f32 %v402, 1.0
    %v404 = vrcp.pop %v403
    %v405 = vmul.f32 1.0, %v404
    %v406 = vmul.f32 %v398, 0.0
    %v407 = vmul.f32 %v398, %v399
    %409 = vrot.lane.b32.xlu0 %v407, 64
    %v410 = vpop.permute.xlu0 %409
    %v412 = vadd.f32 %v406, %v410
    %v413 = vtanh.pop %v412
    %v414 = vmul.f32 %v405, %v413
    %v415 = vpack.c.bf16 %v414, %v414
    %v416 = vld [vmem:[#allocation3] sm:$0xff]
    %v417 = vld [vmem:[#allocation3 + $0x8] sm:$0xff]
    %v418 = vld [vmem:[#allocation3 + $0x10] sm:$0xff]
    %v419 = vld [vmem:[#allocation3 + $0x18] sm:$0xff]
    %v420 = vld [vmem:[#allocation3 + $0x20] sm:$0xff]
    %v421 = vld [vmem:[#allocation3 + $0x28] sm:$0xff]
    %v422 = vld [vmem:[#allocation3 + $0x30] sm:$0xff]
    %v423 = vld [vmem:[#allocation3 + $0x38] sm:$0xff]
    %425 = vrot.lane.b32.xlu0 %v415, 64
    %v426 = vpop.permute.xlu0 %425
    %v435 = vunpack.c.l.b16 %v416
    %v436 = vunpack.c.h.b16 %v416
    %v437 = vunpack.c.l.b16 %v417
    %v438 = vunpack.c.h.b16 %v417
    %v439 = vunpack.c.l.b16 %v418
    %v440 = vunpack.c.h.b16 %v418
    %v441 = vunpack.c.l.b16 %v419
    %v442 = vunpack.c.h.b16 %v419
    %v443 = vunpack.c.l.b16 %v420
    %v444 = vunpack.c.h.b16 %v420
    %v445 = vunpack.c.l.b16 %v421
    %v446 = vunpack.c.h.b16 %v421
    %v447 = vunpack.c.l.b16 %v422
    %v448 = vunpack.c.h.b16 %v422
    %v449 = vunpack.c.l.b16 %v423
    %v450 = vunpack.c.h.b16 %v423
    %v451 = vpack.c.b16 %v437, %v435
    %v452 = vpack.c.b16 %v438, %v436
    %v453 = vpack.c.b16 %v441, %v439
    %v454 = vpack.c.b16 %v442, %v440
    %v455 = vpack.c.b16 %v445, %v443
    %v456 = vpack.c.b16 %v446, %v444
    %v457 = vpack.c.b16 %v449, %v447
    %v458 = vpack.c.b16 %v450, %v448
    %v468 = vsel %vm255, %v426, 0
    %470 = vmatprep.subr.bf16.mxu0 %v452
    %471 = vmatpush1.bf16.msra.mxu0 %v451
    %472 = vmatprep.subr.bf16.mxu0 %v454
    %473 = vmatpush1.bf16.msra.mxu0 %v453
    %474 = vmatprep.subr.bf16.mxu0 %v456
    %475 = vmatpush1.bf16.msra.mxu0 %v455
    %476 = vmatprep.subr.bf16.mxu0 %v458
    %477 = vmatpush1.bf16.msra.mxu0 %v457
    %478 = vmatprep.subr.bf16.mxu0 0
    %479 = vmatpush1.bf16.msra.mxu0 0
    %480 = vmatprep.subr.bf16.mxu0 0
    %481 = vmatpush1.bf16.msra.mxu0 0
    %482 = vmatprep.subr.bf16.mxu0 0
    %483 = vmatpush1.bf16.msra.mxu0 0
    %484 = vmatprep.subr.bf16.mxu0 0
    %485 = vmatpush1.bf16.msra.mxu0 0
    %486 = vmatprep.subr.bf16.mxu0 0
    %487 = vmatpush1.bf16.msra.mxu0 0
    %488 = vmatprep.subr.bf16.mxu0 0
    %489 = vmatpush1.bf16.msra.mxu0 0
    %490 = vmatprep.subr.bf16.mxu0 0
    %491 = vmatpush1.bf16.msra.mxu0 0
    %492 = vmatprep.subr.bf16.mxu0 0
    %493 = vmatpush1.bf16.msra.mxu0 0
    %494 = vmatprep.subr.bf16.mxu0 0
    %495 = vmatpush1.bf16.msra.mxu0 0
    %496 = vmatprep.subr.bf16.mxu0 0
    %497 = vmatpush1.bf16.msra.mxu0 0
    %498 = vmatprep.subr.bf16.mxu0 0
    %499 = vmatpush1.bf16.msra.mxu0 0
    %500 = vmatprep.subr.bf16.mxu0 0
    %501 = vmatpush1.bf16.msra.mxu0 0
    %502 = vmatprep.mubr.bf16.mxu0 0
    %503 = vmatmul.mubr.bf16.gmra.mrb[0].mxu0 %v468
    %v504 = vpop.f32.mrb[0].mxu0
    %v505 = vadd.f32 0.0, %v504
    %v506 = vpop.f32.mrb[0].mxu0
    %v507 = vadd.f32 0.0, %v506
    %v508 = vpop.f32.mrb[0].mxu0
    %v509 = vpop.f32.mrb[0].mxu0
    %510 = vdwg.mxu0
    %v511 = vadd.f32 %v294, %v505
    %v512 = vadd.f32 %v296, %v507
    %v513 = vxor.u32 %v511, 2147483648
    %v514 = vmul.f32 %v513, 1.442695
    %v515 = vpow.pop %v514
    %v516 = vadd.f32 %v515, 1.0
    %v517 = vrcp.pop %v516
    %v518 = vmul.f32 1.0, %v517
    %v519 = vtanh.pop %v512
    %v520 = vxor.u32 %v512, 2147483648
    %v521 = vmul.f32 %v520, 1.442695
    %v522 = vpow.pop %v521
    %v523 = vadd.f32 %v522, 1.0
    %v524 = vrcp.pop %v523
    %v525 = vmul.f32 1.0, %v524
    %v526 = vmul.f32 %v518, 0.0
    %v527 = vmul.f32 %v518, %v519
    %529 = vrot.lane.b32.xlu0 %v527, 64
    %v530 = vpop.permute.xlu0 %529
    %v532 = vadd.f32 %v526, %v530
    %v533 = vtanh.pop %v532
    %v534 = vmul.f32 %v525, %v533
    %v535 = vpack.c.bf16 %v534, %v534
    %537 = vrot.lane.b32.xlu0 %v535, 64
    %v538 = vpop.permute.xlu0 %537
    %v540 = vsel %vm255, %v538, 0
    %542 = vmatprep.subr.bf16.mxu0 %v240
    %543 = vmatpush1.bf16.msra.mxu0 %v239
    %544 = vmatprep.subr.bf16.mxu0 %v242
    %545 = vmatpush1.bf16.msra.mxu0 %v241
    %546 = vmatprep.subr.bf16.mxu0 %v244
    %547 = vmatpush1.bf16.msra.mxu0 %v243
    %548 = vmatprep.subr.bf16.mxu0 %v246
    %549 = vmatpush1.bf16.msra.mxu0 %v245
    %550 = vmatprep.subr.bf16.mxu0 0
    %551 = vmatpush1.bf16.msra.mxu0 0
    %552 = vmatprep.subr.bf16.mxu0 0
    %553 = vmatpush1.bf16.msra.mxu0 0
    %554 = vmatprep.subr.bf16.mxu0 0
    %555 = vmatpush1.bf16.msra.mxu0 0
    %556 = vmatprep.subr.bf16.mxu0 0
    %557 = vmatpush1.bf16.msra.mxu0 0
    %558 = vmatprep.subr.bf16.mxu0 0
    %559 = vmatpush1.bf16.msra.mxu0 0
    %560 = vmatprep.subr.bf16.mxu0 0
    %561 = vmatpush1.bf16.msra.mxu0 0
    %562 = vmatprep.subr.bf16.mxu0 0
    %563 = vmatpush1.bf16.msra.mxu0 0
    %564 = vmatprep.subr.bf16.mxu0 0
    %565 = vmatpush1.bf16.msra.mxu0 0
    %566 = vmatprep.subr.bf16.mxu0 0
    %567 = vmatpush1.bf16.msra.mxu0 0
    %568 = vmatprep.subr.bf16.mxu0 0
    %569 = vmatpush1.bf16.msra.mxu0 0
    %570 = vmatprep.subr.bf16.mxu0 0
    %571 = vmatpush1.bf16.msra.mxu0 0
    %572 = vmatprep.subr.bf16.mxu0 0
    %573 = vmatpush1.bf16.msra.mxu0 0
    %574 = vmatprep.mubr.bf16.mxu0 0
    %575 = vmatmul.mubr.bf16.gmra.mrb[0].mxu0 %v540
    %v576 = vpop.f32.mrb[0].mxu0
    %v577 = vadd.f32 %v208, %v576
    %v578 = vpop.f32.mrb[0].mxu0
    %v579 = vadd.f32 %v212, %v578
    %v580 = vpop.f32.mrb[0].mxu0
    %v581 = vpop.f32.mrb[0].mxu0
    %582 = vdwg.mxu0
    %s583 = scalar_lea.vmem [#allocation2], 16
    %v584 = vld [vmem:[%s583] sm:$0xff]
    %v585 = vld [vmem:[%s583 + $0x8] sm:$0xff]
    %586 = vmatprep.subr.bf16.mxu0 %v335
    %587 = vmatpush1.bf16.msra.mxu0 %v334
    %588 = vmatprep.subr.bf16.mxu0 %v337
    %589 = vmatpush1.bf16.msra.mxu0 %v336
    %590 = vmatprep.subr.bf16.mxu0 %v339
    %591 = vmatpush1.bf16.msra.mxu0 %v338
    %592 = vmatprep.subr.bf16.mxu0 %v341
    %593 = vmatpush1.bf16.msra.mxu0 %v340
    %594 = vmatprep.subr.bf16.mxu0 0
    %595 = vmatpush1.bf16.msra.mxu0 0
    %596 = vmatprep.subr.bf16.mxu0 0
    %597 = vmatpush1.bf16.msra.mxu0 0
    %598 = vmatprep.subr.bf16.mxu0 0
    %599 = vmatpush1.bf16.msra.mxu0 0
    %600 = vmatprep.subr.bf16.mxu0 0
    %601 = vmatpush1.bf16.msra.mxu0 0
    %602 = vmatprep.subr.bf16.mxu0 0
    %603 = vmatpush1.bf16.msra.mxu0 0
    %604 = vmatprep.subr.bf16.mxu0 0
    %605 = vmatpush1.bf16.msra.mxu0 0
    %606 = vmatprep.subr.bf16.mxu0 0
    %607 = vmatpush1.bf16.msra.mxu0 0
    %608 = vmatprep.subr.bf16.mxu0 0
    %609 = vmatpush1.bf16.msra.mxu0 0
    %610 = vmatprep.subr.bf16.mxu0 0
    %611 = vmatpush1.bf16.msra.mxu0 0
    %612 = vmatprep.subr.bf16.mxu0 0
    %613 = vmatpush1.bf16.msra.mxu0 0
    %614 = vmatprep.subr.bf16.mxu0 0
    %615 = vmatpush1.bf16.msra.mxu0 0
    %616 = vmatprep.subr.bf16.mxu0 0
    %617 = vmatpush1.bf16.msra.mxu0 0
    %618 = vmatprep.mubr.bf16.mxu0 0
    %619 = vmatmul.mubr.bf16.gmra.mrb[0].mxu0 %v468
    %v620 = vpop.f32.mrb[0].mxu0
    %v621 = vadd.f32 0.0, %v620
    %v622 = vpop.f32.mrb[0].mxu0
    %v623 = vadd.f32 0.0, %v622
    %v624 = vpop.f32.mrb[0].mxu0
    %v625 = vpop.f32.mrb[0].mxu0
    %626 = vdwg.mxu0
    %v627 = vadd.f32 %v584, %v621
    %v628 = vadd.f32 %v585, %v623
    %v629 = vxor.u32 %v627, 2147483648
    %v630 = vmul.f32 %v629, 1.442695
    %v631 = vpow.pop %v630
    %v632 = vadd.f32 %v631, 1.0
    %v633 = vrcp.pop %v632
    %v634 = vmul.f32 1.0, %v633
    %v635 = vtanh.pop %v628
    %v636 = vxor.u32 %v628, 2147483648
    %v637 = vmul.f32 %v636, 1.442695
    %v638 = vpow.pop %v637
    %v639 = vadd.f32 %v638, 1.0
    %v640 = vrcp.pop %v639
    %v641 = vmul.f32 1.0, %v640
    %v642 = vmul.f32 %v634, %v412
    %v643 = vmul.f32 %v634, %v635
    %645 = vrot.lane.b32.xlu0 %v643, 64
    %v646 = vpop.permute.xlu0 %645
    %v648 = vadd.f32 %v642, %v646
    %v649 = vtanh.pop %v648
    %v650 = vmul.f32 %v641, %v649
    %v651 = vpack.c.bf16 %v650, %v650
    %653 = vrot.lane.b32.xlu0 %v651, 64
    %v654 = vpop.permute.xlu0 %653
    %v656 = vsel %vm255, %v654, 0
    %658 = vmatprep.subr.bf16.mxu0 %v452
    %659 = vmatpush1.bf16.msra.mxu0 %v451
    %660 = vmatprep.subr.bf16.mxu0 %v454
    %661 = vmatpush1.bf16.msra.mxu0 %v453
    %662 = vmatprep.subr.bf16.mxu0 %v456
    %663 = vmatpush1.bf16.msra.mxu0 %v455
    %664 = vmatprep.subr.bf16.mxu0 %v458
    %665 = vmatpush1.bf16.msra.mxu0 %v457
    %666 = vmatprep.subr.bf16.mxu0 0
    %667 = vmatpush1.bf16.msra.mxu0 0
    %668 = vmatprep.subr.bf16.mxu0 0
    %669 = vmatpush1.bf16.msra.mxu0 0
    %670 = vmatprep.subr.bf16.mxu0 0
    %671 = vmatpush1.bf16.msra.mxu0 0
    %672 = vmatprep.subr.bf16.mxu0 0
    %673 = vmatpush1.bf16.msra.mxu0 0
    %674 = vmatprep.subr.bf16.mxu0 0
    %675 = vmatpush1.bf16.msra.mxu0 0
    %676 = vmatprep.subr.bf16.mxu0 0
    %677 = vmatpush1.bf16.msra.mxu0 0
    %678 = vmatprep.subr.bf16.mxu0 0
    %679 = vmatpush1.bf16.msra.mxu0 0
    %680 = vmatprep.subr.bf16.mxu0 0
    %681 = vmatpush1.bf16.msra.mxu0 0
    %682 = vmatprep.subr.bf16.mxu0 0
    %683 = vmatpush1.bf16.msra.mxu0 0
    %684 = vmatprep.subr.bf16.mxu0 0
    %685 = vmatpush1.bf16.msra.mxu0 0
    %686 = vmatprep.subr.bf16.mxu0 0
    %687 = vmatpush1.bf16.msra.mxu0 0
    %688 = vmatprep.subr.bf16.mxu0 0
    %689 = vmatpush1.bf16.msra.mxu0 0
    %690 = vmatprep.mubr.bf16.mxu0 0
    %691 = vmatmul.mubr.bf16.gmra.mrb[0].mxu0 %v656
    %v692 = vpop.f32.mrb[0].mxu0
    %v693 = vadd.f32 0.0, %v692
    %v694 = vpop.f32.mrb[0].mxu0
    %v695 = vadd.f32 0.0, %v694
    %v696 = vpop.f32.mrb[0].mxu0
    %v697 = vpop.f32.mrb[0].mxu0
    %698 = vdwg.mxu0
    %v699 = vadd.f32 %v577, %v693
    %v700 = vadd.f32 %v579, %v695
    %v701 = vxor.u32 %v699, 2147483648
    %v702 = vmul.f32 %v701, 1.442695
    %v703 = vpow.pop %v702
    %v704 = vadd.f32 %v703, 1.0
    %v705 = vrcp.pop %v704
    %v706 = vmul.f32 1.0, %v705
    %v707 = vtanh.pop %v700
    %v708 = vxor.u32 %v700, 2147483648
    %v709 = vmul.f32 %v708, 1.442695
    %v710 = vpow.pop %v709
    %v711 = vadd.f32 %v710, 1.0
    %v712 = vrcp.pop %v711
    %v713 = vmul.f32 1.0, %v712
    %v714 = vmul.f32 %v706, %v532
    %v715 = vmul.f32 %v706, %v707
    %717 = vrot.lane.b32.xlu0 %v715, 64
    %v718 = vpop.permute.xlu0 %717
    %v720 = vadd.f32 %v714, %v718
    %v721 = vtanh.pop %v720
    %v722 = vmul.f32 %v713, %v721
    %v723 = vpack.c.bf16 %v722, %v722
    %725 = vrot.lane.b32.xlu0 %v723, 64
    %v726 = vpop.permute.xlu0 %725
    %v728 = vsel %vm255, %v726, 0
    %730 = vmatprep.subr.bf16.mxu0 %v240
    %731 = vmatpush1.bf16.msra.mxu0 %v239
    %732 = vmatprep.subr.bf16.mxu0 %v242
    %733 = vmatpush1.bf16.msra.mxu0 %v241
    %734 = vmatprep.subr.bf16.mxu0 %v244
    %735 = vmatpush1.bf16.msra.mxu0 %v243
    %736 = vmatprep.subr.bf16.mxu0 %v246
    %737 = vmatpush1.bf16.msra.mxu0 %v245
    %738 = vmatprep.subr.bf16.mxu0 0
    %739 = vmatpush1.bf16.msra.mxu0 0
    %740 = vmatprep.subr.bf16.mxu0 0
    %741 = vmatpush1.bf16.msra.mxu0 0
    %742 = vmatprep.subr.bf16.mxu0 0
    %743 = vmatpush1.bf16.msra.mxu0 0
    %744 = vmatprep.subr.bf16.mxu0 0
    %745 = vmatpush1.bf16.msra.mxu0 0
    %746 = vmatprep.subr.bf16.mxu0 0
    %747 = vmatpush1.bf16.msra.mxu0 0
    %748 = vmatprep.subr.bf16.mxu0 0
    %749 = vmatpush1.bf16.msra.mxu0 0
    %750 = vmatprep.subr.bf16.mxu0 0
    %751 = vmatpush1.bf16.msra.mxu0 0
    %752 = vmatprep.subr.bf16.mxu0 0
    %753 = vmatpush1.bf16.msra.mxu0 0
    %754 = vmatprep.subr.bf16.mxu0 0
    %755 = vmatpush1.bf16.msra.mxu0 0
    %756 = vmatprep.subr.bf16.mxu0 0
    %757 = vmatpush1.bf16.msra.mxu0 0
    %758 = vmatprep.subr.bf16.mxu0 0
    %759 = vmatpush1.bf16.msra.mxu0 0
    %760 = vmatprep.subr.bf16.mxu0 0
    %761 = vmatpush1.bf16.msra.mxu0 0
    %762 = vmatprep.mubr.bf16.mxu0 0
    %763 = vmatmul.mubr.bf16.gmra.mrb[0].mxu0 %v728
    %v764 = vpop.f32.mrb[0].mxu0
    %v765 = vadd.f32 %v208, %v764
    %v766 = vpop.f32.mrb[0].mxu0
    %v767 = vadd.f32 %v212, %v766
    %v768 = vpop.f32.mrb[0].mxu0
    %v769 = vpop.f32.mrb[0].mxu0
    %770 = vdwg.mxu0
    %s771 = scalar_lea.vmem [#allocation2], 32
    %v772 = vld [vmem:[%s771] sm:$0xff]
    %v773 = vld [vmem:[%s771 + $0x8] sm:$0xff]
    %774 = vmatprep.subr.bf16.mxu0 %v335
    %775 = vmatpush1.bf16.msra.mxu0 %v334
    %776 = vmatprep.subr.bf16.mxu0 %v337
    %777 = vmatpush1.bf16.msra.mxu0 %v336
    %778 = vmatprep.subr.bf16.mxu0 %v339
    %779 = vmatpush1.bf16.msra.mxu0 %v338
    %780 = vmatprep.subr.bf16.mxu0 %v341
    %781 = vmatpush1.bf16.msra.mxu0 %v340
    %782 = vmatprep.subr.bf16.mxu0 0
    %783 = vmatpush1.bf16.msra.mxu0 0
    %784 = vmatprep.subr.bf16.mxu0 0
    %785 = vmatpush1.bf16.msra.mxu0 0
    %786 = vmatprep.subr.bf16.mxu0 0
    %787 = vmatpush1.bf16.msra.mxu0 0
    %788 = vmatprep.subr.bf16.mxu0 0
    %789 = vmatpush1.bf16.msra.mxu0 0
    %790 = vmatprep.subr.bf16.mxu0 0
    %791 = vmatpush1.bf16.msra.mxu0 0
    %792 = vmatprep.subr.bf16.mxu0 0
    %793 = vmatpush1.bf16.msra.mxu0 0
    %794 = vmatprep.subr.bf16.mxu0 0
    %795 = vmatpush1.bf16.msra.mxu0 0
    %796 = vmatprep.subr.bf16.mxu0 0
    %797 = vmatpush1.bf16.msra.mxu0 0
    %798 = vmatprep.subr.bf16.mxu0 0
    %799 = vmatpush1.bf16.msra.mxu0 0
    %800 = vmatprep.subr.bf16.mxu0 0
    %801 = vmatpush1.bf16.msra.mxu0 0
    %802 = vmatprep.subr.bf16.mxu0 0
    %803 = vmatpush1.bf16.msra.mxu0 0
    %804 = vmatprep.subr.bf16.mxu0 0
    %805 = vmatpush1.bf16.msra.mxu0 0
    %806 = vmatprep.mubr.bf16.mxu0 0
    %807 = vmatmul.mubr.bf16.gmra.mrb[0].mxu0 %v656
    %v808 = vpop.f32.mrb[0].mxu0
    %v809 = vadd.f32 0.0, %v808
    %v810 = vpop.f32.mrb[0].mxu0
    %v811 = vadd.f32 0.0, %v810
    %v812 = vpop.f32.mrb[0].mxu0
    %v813 = vpop.f32.mrb[0].mxu0
    %814 = vdwg.mxu0
    %v815 = vadd.f32 %v772, %v809
    %v816 = vadd.f32 %v773, %v811
    %v817 = vxor.u32 %v815, 2147483648
    %v818 = vmul.f32 %v817, 1.442695
    %v819 = vpow.pop %v818
    %v820 = vadd.f32 %v819, 1.0
    %v821 = vrcp.pop %v820
    %v822 = vmul.f32 1.0, %v821
    %v823 = vtanh.pop %v816
    %v824 = vxor.u32 %v816, 2147483648
    %v825 = vmul.f32 %v824, 1.442695
    %v826 = vpow.pop %v825
    %v827 = vadd.f32 %v826, 1.0
    %v828 = vrcp.pop %v827
    %v829 = vmul.f32 1.0, %v828
    %v830 = vmul.f32 %v822, %v648
    %v831 = vmul.f32 %v822, %v823
    %833 = vrot.lane.b32.xlu0 %v831, 64
    %v834 = vpop.permute.xlu0 %833
    %v836 = vadd.f32 %v830, %v834
    %v837 = vtanh.pop %v836
    %v838 = vmul.f32 %v829, %v837
    %v839 = vpack.c.bf16 %v838, %v838
    %841 = vrot.lane.b32.xlu0 %v839, 64
    %v842 = vpop.permute.xlu0 %841
    %v844 = vsel %vm255, %v842, 0
    %846 = vmatprep.subr.bf16.mxu0 %v452
    %847 = vmatpush1.bf16.msra.mxu0 %v451
    %848 = vmatprep.subr.bf16.mxu0 %v454
    %849 = vmatpush1.bf16.msra.mxu0 %v453
    %850 = vmatprep.subr.bf16.mxu0 %v456
    %851 = vmatpush1.bf16.msra.mxu0 %v455
    %852 = vmatprep.subr.bf16.mxu0 %v458
    %853 = vmatpush1.bf16.msra.mxu0 %v457
    %854 = vmatprep.subr.bf16.mxu0 0
    %855 = vmatpush1.bf16.msra.mxu0 0
    %856 = vmatprep.subr.bf16.mxu0 0
    %857 = vmatpush1.bf16.msra.mxu0 0
    %858 = vmatprep.subr.bf16.mxu0 0
    %859 = vmatpush1.bf16.msra.mxu0 0
    %860 = vmatprep.subr.bf16.mxu0 0
    %861 = vmatpush1.bf16.msra.mxu0 0
    %862 = vmatprep.subr.bf16.mxu0 0
    %863 = vmatpush1.bf16.msra.mxu0 0
    %864 = vmatprep.subr.bf16.mxu0 0
    %865 = vmatpush1.bf16.msra.mxu0 0
    %866 = vmatprep.subr.bf16.mxu0 0
    %867 = vmatpush1.bf16.msra.mxu0 0
    %868 = vmatprep.subr.bf16.mxu0 0
    %869 = vmatpush1.bf16.msra.mxu0 0
    %870 = vmatprep.subr.bf16.mxu0 0
    %871 = vmatpush1.bf16.msra.mxu0 0
    %872 = vmatprep.subr.bf16.mxu0 0
    %873 = vmatpush1.bf16.msra.mxu0 0
    %874 = vmatprep.subr.bf16.mxu0 0
    %875 = vmatpush1.bf16.msra.mxu0 0
    %876 = vmatprep.subr.bf16.mxu0 0
    %877 = vmatpush1.bf16.msra.mxu0 0
    %878 = vmatprep.mubr.bf16.mxu0 0
    %879 = vmatmul.mubr.bf16.gmra.mrb[0].mxu0 %v844
    %v880 = vpop.f32.mrb[0].mxu0
    %v881 = vadd.f32 0.0, %v880
    %v882 = vpop.f32.mrb[0].mxu0
    %v883 = vadd.f32 0.0, %v882
    %v884 = vpop.f32.mrb[0].mxu0
    %v885 = vpop.f32.mrb[0].mxu0
    %886 = vdwg.mxu0
    %v887 = vadd.f32 %v765, %v881
    %v888 = vadd.f32 %v767, %v883
    %v889 = vxor.u32 %v887, 2147483648
    %v890 = vmul.f32 %v889, 1.442695
    %v891 = vpow.pop %v890
    %v892 = vadd.f32 %v891, 1.0
    %v893 = vrcp.pop %v892
    %v894 = vmul.f32 1.0, %v893
    %v895 = vtanh.pop %v888
    %v896 = vxor.u32 %v888, 2147483648
    %v897 = vmul.f32 %v896, 1.442695
    %v898 = vpow.pop %v897
    %v899 = vadd.f32 %v898, 1.0
    %v900 = vrcp.pop %v899
    %v901 = vmul.f32 1.0, %v900
    %v902 = vmul.f32 %v894, %v720
    %v903 = vmul.f32 %v894, %v895
    %905 = vrot.lane.b32.xlu0 %v903, 64
    %v906 = vpop.permute.xlu0 %905
    %v908 = vadd.f32 %v902, %v906
    %v909 = vtanh.pop %v908
    %v910 = vmul.f32 %v901, %v909
    %v911 = vpack.c.bf16 %v910, %v910
    %913 = vrot.lane.b32.xlu0 %v911, 64
    %v914 = vpop.permute.xlu0 %913
    %v916 = vsel %vm255, %v914, 0
    %918 = vmatprep.subr.bf16.mxu0 %v240
    %919 = vmatpush1.bf16.msra.mxu0 %v239
    %920 = vmatprep.subr.bf16.mxu0 %v242
    %921 = vmatpush1.bf16.msra.mxu0 %v241
    %922 = vmatprep.subr.bf16.mxu0 %v244
    %923 = vmatpush1.bf16.msra.mxu0 %v243
    %924 = vmatprep.subr.bf16.mxu0 %v246
    %925 = vmatpush1.bf16.msra.mxu0 %v245
    %926 = vmatprep.subr.bf16.mxu0 0
    %927 = vmatpush1.bf16.msra.mxu0 0
    %928 = vmatprep.subr.bf16.mxu0 0
    %929 = vmatpush1.bf16.msra.mxu0 0
    %930 = vmatprep.subr.bf16.mxu0 0
    %931 = vmatpush1.bf16.msra.mxu0 0
    %932 = vmatprep.subr.bf16.mxu0 0
    %933 = vmatpush1.bf16.msra.mxu0 0
    %934 = vmatprep.subr.bf16.mxu0 0
    %935 = vmatpush1.bf16.msra.mxu0 0
    %936 = vmatprep.subr.bf16.mxu0 0
    %937 = vmatpush1.bf16.msra.mxu0 0
    %938 = vmatprep.subr.bf16.mxu0 0
    %939 = vmatpush1.bf16.msra.mxu0 0
    %940 = vmatprep.subr.bf16.mxu0 0
    %941 = vmatpush1.bf16.msra.mxu0 0
    %942 = vmatprep.subr.bf16.mxu0 0
    %943 = vmatpush1.bf16.msra.mxu0 0
    %944 = vmatprep.subr.bf16.mxu0 0
    %945 = vmatpush1.bf16.msra.mxu0 0
    %946 = vmatprep.subr.bf16.mxu0 0
    %947 = vmatpush1.bf16.msra.mxu0 0
    %948 = vmatprep.subr.bf16.mxu0 0
    %949 = vmatpush1.bf16.msra.mxu0 0
    %950 = vmatprep.mubr.bf16.mxu0 0
    %951 = vmatmul.mubr.bf16.gmra.mrb[0].mxu0 %v916
    %v952 = vpop.f32.mrb[0].mxu0
    %v953 = vadd.f32 %v208, %v952
    %v954 = vpop.f32.mrb[0].mxu0
    %v955 = vadd.f32 %v212, %v954
    %v956 = vpop.f32.mrb[0].mxu0
    %v957 = vpop.f32.mrb[0].mxu0
    %958 = vdwg.mxu0
    %s959 = scalar_lea.vmem [#allocation2], 48
    %v960 = vld [vmem:[%s959] sm:$0xff]
    %v961 = vld [vmem:[%s959 + $0x8] sm:$0xff]
    %962 = vmatprep.subr.bf16.mxu0 %v335
    %963 = vmatpush1.bf16.msra.mxu0 %v334
    %964 = vmatprep.subr.bf16.mxu0 %v337
    %965 = vmatpush1.bf16.msra.mxu0 %v336
    %966 = vmatprep.subr.bf16.mxu0 %v339
    %967 = vmatpush1.bf16.msra.mxu0 %v338
    %968 = vmatprep.subr.bf16.mxu0 %v341
    %969 = vmatpush1.bf16.msra.mxu0 %v340
    %970 = vmatprep.subr.bf16.mxu0 0
    %971 = vmatpush1.bf16.msra.mxu0 0
    %972 = vmatprep.subr.bf16.mxu0 0
    %973 = vmatpush1.bf16.msra.mxu0 0
    %974 = vmatprep.subr.bf16.mxu0 0
    %975 = vmatpush1.bf16.msra.mxu0 0
    %976 = vmatprep.subr.bf16.mxu0 0
    %977 = vmatpush1.bf16.msra.mxu0 0
    %978 = vmatprep.subr.bf16.mxu0 0
    %979 = vmatpush1.bf16.msra.mxu0 0
    %980 = vmatprep.subr.bf16.mxu0 0
    %981 = vmatpush1.bf16.msra.mxu0 0
    %982 = vmatprep.subr.bf16.mxu0 0
    %983 = vmatpush1.bf16.msra.mxu0 0
    %984 = vmatprep.subr.bf16.mxu0 0
    %985 = vmatpush1.bf16.msra.mxu0 0
    %986 = vmatprep.subr.bf16.mxu0 0
    %987 = vmatpush1.bf16.msra.mxu0 0
    %988 = vmatprep.subr.bf16.mxu0 0
    %989 = vmatpush1.bf16.msra.mxu0 0
    %990 = vmatprep.subr.bf16.mxu0 0
    %991 = vmatpush1.bf16.msra.mxu0 0
    %992 = vmatprep.subr.bf16.mxu0 0
    %993 = vmatpush1.bf16.msra.mxu0 0
    %994 = vmatprep.mubr.bf16.mxu0 0
    %995 = vmatmul.mubr.bf16.gmra.mrb[0].mxu0 %v844
    %v996 = vpop.f32.mrb[0].mxu0
    %v997 = vadd.f32 0.0, %v996
    %v998 = vpop.f32.mrb[0].mxu0
    %v999 = vadd.f32 0.0, %v998
    %v1000 = vpop.f32.mrb[0].mxu0
    %v1001 = vpop.f32.mrb[0].mxu0
    %1002 = vdwg.mxu0
    %v1003 = vadd.f32 %v960, %v997
    %v1004 = vadd.f32 %v961, %v999
    %v1005 = vxor.u32 %v1003, 2147483648
    %v1006 = vmul.f32 %v1005, 1.442695
    %v1007 = vpow.pop %v1006
    %v1008 = vadd.f32 %v1007, 1.0
    %v1009 = vrcp.pop %v1008
    %v1010 = vmul.f32 1.0, %v1009
    %v1011 = vtanh.pop %v1004
    %v1012 = vxor.u32 %v1004, 2147483648
    %v1013 = vmul.f32 %v1012, 1.442695
    %v1014 = vpow.pop %v1013
    %v1015 = vadd.f32 %v1014, 1.0
    %v1016 = vrcp.pop %v1015
    %v1017 = vmul.f32 1.0, %v1016
    %v1018 = vmul.f32 %v1010, %v836
    %v1019 = vmul.f32 %v1010, %v1011
    %1021 = vrot.lane.b32.xlu0 %v1019, 64
    %v1022 = vpop.permute.xlu0 %1021
    %v1024 = vadd.f32 %v1018, %v1022
    %v1025 = vtanh.pop %v1024
    %v1026 = vmul.f32 %v1017, %v1025
    %v1027 = vpack.c.bf16 %v1026, %v1026
    %1029 = vrot.lane.b32.xlu0 %v1027, 64
    %v1030 = vpop.permute.xlu0 %1029
    %v1032 = vsel %vm255, %v1030, 0
    %1034 = vmatprep.subr.bf16.mxu0 %v452
    %1035 = vmatpush1.bf16.msra.mxu0 %v451
    %1036 = vmatprep.subr.bf16.mxu0 %v454
    %1037 = vmatpush1.bf16.msra.mxu0 %v453
    %1038 = vmatprep.subr.bf16.mxu0 %v456
    %1039 = vmatpush1.bf16.msra.mxu0 %v455
    %1040 = vmatprep.subr.bf16.mxu0 %v458
    %1041 = vmatpush1.bf16.msra.mxu0 %v457
    %1042 = vmatprep.subr.bf16.mxu0 0
    %1043 = vmatpush1.bf16.msra.mxu0 0
    %1044 = vmatprep.subr.bf16.mxu0 0
    %1045 = vmatpush1.bf16.msra.mxu0 0
    %1046 = vmatprep.subr.bf16.mxu0 0
    %1047 = vmatpush1.bf16.msra.mxu0 0
    %1048 = vmatprep.subr.bf16.mxu0 0
    %1049 = vmatpush1.bf16.msra.mxu0 0
    %1050 = vmatprep.subr.bf16.mxu0 0
    %1051 = vmatpush1.bf16.msra.mxu0 0
    %1052 = vmatprep.subr.bf16.mxu0 0
    %1053 = vmatpush1.bf16.msra.mxu0 0
    %1054 = vmatprep.subr.bf16.mxu0 0
    %1055 = vmatpush1.bf16.msra.mxu0 0
    %1056 = vmatprep.subr.bf16.mxu0 0
    %1057 = vmatpush1.bf16.msra.mxu0 0
    %1058 = vmatprep.subr.bf16.mxu0 0
    %1059 = vmatpush1.bf16.msra.mxu0 0
    %1060 = vmatprep.subr.bf16.mxu0 0
    %1061 = vmatpush1.bf16.msra.mxu0 0
    %1062 = vmatprep.subr.bf16.mxu0 0
    %1063 = vmatpush1.bf16.msra.mxu0 0
    %1064 = vmatprep.subr.bf16.mxu0 0
    %1065 = vmatpush1.bf16.msra.mxu0 0
    %1066 = vmatprep.mubr.bf16.mxu0 0
    %1067 = vmatmul.mubr.bf16.gmra.mrb[0].mxu0 %v1032
    %v1068 = vpop.f32.mrb[0].mxu0
    %v1069 = vadd.f32 0.0, %v1068
    %v1070 = vpop.f32.mrb[0].mxu0
    %v1071 = vadd.f32 0.0, %v1070
    %v1072 = vpop.f32.mrb[0].mxu0
    %v1073 = vpop.f32.mrb[0].mxu0
    %1074 = vdwg.mxu0
    %v1075 = vadd.f32 %v953, %v1069
    %v1076 = vadd.f32 %v955, %v1071
    %v1077 = vxor.u32 %v1075, 2147483648
    %v1078 = vmul.f32 %v1077, 1.442695
    %v1079 = vpow.pop %v1078
    %v1080 = vadd.f32 %v1079, 1.0
    %v1081 = vrcp.pop %v1080
    %v1082 = vmul.f32 1.0, %v1081
    %v1083 = vtanh.pop %v1076
    %v1084 = vxor.u32 %v1076, 2147483648
    %v1085 = vmul.f32 %v1084, 1.442695
    %v1086 = vpow.pop %v1085
    %v1087 = vadd.f32 %v1086, 1.0
    %v1088 = vrcp.pop %v1087
    %v1089 = vmul.f32 1.0, %v1088
    %v1090 = vmul.f32 %v1082, %v908
    %v1091 = vmul.f32 %v1082, %v1083
    %1093 = vrot.lane.b32.xlu0 %v1091, 64
    %v1094 = vpop.permute.xlu0 %1093
    %v1096 = vadd.f32 %v1090, %v1094
    %v1097 = vtanh.pop %v1096
    %v1098 = vmul.f32 %v1089, %v1097
    %v1099 = vpack.c.bf16 %v1098, %v1098
    %1101 = vrot.lane.b32.xlu0 %v1099, 64
    %v1102 = vpop.permute.xlu0 %1101
    %v1104 = vsel %vm255, %v1102, 0
    %1106 = vmatprep.subr.bf16.mxu0 %v240
    %1107 = vmatpush1.bf16.msra.mxu0 %v239
    %1108 = vmatprep.subr.bf16.mxu0 %v242
    %1109 = vmatpush1.bf16.msra.mxu0 %v241
    %1110 = vmatprep.subr.bf16.mxu0 %v244
    %1111 = vmatpush1.bf16.msra.mxu0 %v243
    %1112 = vmatprep.subr.bf16.mxu0 %v246
    %1113 = vmatpush1.bf16.msra.mxu0 %v245
    %1114 = vmatprep.subr.bf16.mxu0 0
    %1115 = vmatpush1.bf16.msra.mxu0 0
    %1116 = vmatprep.subr.bf16.mxu0 0
    %1117 = vmatpush1.bf16.msra.mxu0 0
    %1118 = vmatprep.subr.bf16.mxu0 0
    %1119 = vmatpush1.bf16.msra.mxu0 0
    %1120 = vmatprep.subr.bf16.mxu0 0
    %1121 = vmatpush1.bf16.msra.mxu0 0
    %1122 = vmatprep.subr.bf16.mxu0 0
    %1123 = vmatpush1.bf16.msra.mxu0 0
    %1124 = vmatprep.subr.bf16.mxu0 0
    %1125 = vmatpush1.bf16.msra.mxu0 0
    %1126 = vmatprep.subr.bf16.mxu0 0
    %1127 = vmatpush1.bf16.msra.mxu0 0
    %1128 = vmatprep.subr.bf16.mxu0 0
    %1129 = vmatpush1.bf16.msra.mxu0 0
    %1130 = vmatprep.subr.bf16.mxu0 0
    %1131 = vmatpush1.bf16.msra.mxu0 0
    %1132 = vmatprep.subr.bf16.mxu0 0
    %1133 = vmatpush1.bf16.msra.mxu0 0
    %1134 = vmatprep.subr.bf16.mxu0 0
    %1135 = vmatpush1.bf16.msra.mxu0 0
    %1136 = vmatprep.subr.bf16.mxu0 0
    %1137 = vmatpush1.bf16.msra.mxu0 0
    %1138 = vmatprep.mubr.bf16.mxu0 0
    %1139 = vmatmul.mubr.bf16.gmra.mrb[0].mxu0 %v1104
    %v1140 = vpop.f32.mrb[0].mxu0
    %v1141 = vadd.f32 %v208, %v1140
    %v1142 = vpop.f32.mrb[0].mxu0
    %v1143 = vadd.f32 %v212, %v1142
    %v1144 = vpop.f32.mrb[0].mxu0
    %v1145 = vpop.f32.mrb[0].mxu0
    %1146 = vdwg.mxu0
    %s1147 = scalar_lea.vmem [#allocation2], 64
    %v1148 = vld [vmem:[%s1147] sm:$0xff]
    %v1149 = vld [vmem:[%s1147 + $0x8] sm:$0xff]
    %1150 = vmatprep.subr.bf16.mxu0 %v335
    %1151 = vmatpush1.bf16.msra.mxu0 %v334
    %1152 = vmatprep.subr.bf16.mxu0 %v337
    %1153 = vmatpush1.bf16.msra.mxu0 %v336
    %1154 = vmatprep.subr.bf16.mxu0 %v339
    %1155 = vmatpush1.bf16.msra.mxu0 %v338
    %1156 = vmatprep.subr.bf16.mxu0 %v341
    %1157 = vmatpush1.bf16.msra.mxu0 %v340
    %1158 = vmatprep.subr.bf16.mxu0 0
    %1159 = vmatpush1.bf16.msra.mxu0 0
    %1160 = vmatprep.subr.bf16.mxu0 0
    %1161 = vmatpush1.bf16.msra.mxu0 0
    %1162 = vmatprep.subr.bf16.mxu0 0
    %1163 = vmatpush1.bf16.msra.mxu0 0
    %1164 = vmatprep.subr.bf16.mxu0 0
    %1165 = vmatpush1.bf16.msra.mxu0 0
    %1166 = vmatprep.subr.bf16.mxu0 0
    %1167 = vmatpush1.bf16.msra.mxu0 0
    %1168 = vmatprep.subr.bf16.mxu0 0
    %1169 = vmatpush1.bf16.msra.mxu0 0
    %1170 = vmatprep.subr.bf16.mxu0 0
    %1171 = vmatpush1.bf16.msra.mxu0 0
    %1172 = vmatprep.subr.bf16.mxu0 0
    %1173 = vmatpush1.bf16.msra.mxu0 0
    %1174 = vmatprep.subr.bf16.mxu0 0
    %1175 = vmatpush1.bf16.msra.mxu0 0
    %1176 = vmatprep.subr.bf16.mxu0 0
    %1177 = vmatpush1.bf16.msra.mxu0 0
    %1178 = vmatprep.subr.bf16.mxu0 0
    %1179 = vmatpush1.bf16.msra.mxu0 0
    %1180 = vmatprep.subr.bf16.mxu0 0
    %1181 = vmatpush1.bf16.msra.mxu0 0
    %1182 = vmatprep.mubr.bf16.mxu0 0
    %1183 = vmatmul.mubr.bf16.gmra.mrb[0].mxu0 %v1032
    %v1184 = vpop.f32.mrb[0].mxu0
    %v1185 = vadd.f32 0.0, %v1184
    %v1186 = vpop.f32.mrb[0].mxu0
    %v1187 = vadd.f32 0.0, %v1186
    %v1188 = vpop.f32.mrb[0].mxu0
    %v1189 = vpop.f32.mrb[0].mxu0
    %1190 = vdwg.mxu0
    %v1191 = vadd.f32 %v1148, %v1185
    %v1192 = vadd.f32 %v1149, %v1187
    %v1193 = vxor.u32 %v1191, 2147483648
    %v1194 = vmul.f32 %v1193, 1.442695
    %v1195 = vpow.pop %v1194
    %v1196 = vadd.f32 %v1195, 1.0
    %v1197 = vrcp.pop %v1196
    %v1198 = vmul.f32 1.0, %v1197
    %v1199 = vtanh.pop %v1192
    %v1200 = vxor.u32 %v1192, 2147483648
    %v1201 = vmul.f32 %v1200, 1.442695
    %v1202 = vpow.pop %v1201
    %v1203 = vadd.f32 %v1202, 1.0
    %v1204 = vrcp.pop %v1203
    %v1205 = vmul.f32 1.0, %v1204
    %v1206 = vmul.f32 %v1198, %v1024
    %v1207 = vmul.f32 %v1198, %v1199
    %1209 = vrot.lane.b32.xlu0 %v1207, 64
    %v1210 = vpop.permute.xlu0 %1209
    %v1212 = vadd.f32 %v1206, %v1210
    %v1213 = vtanh.pop %v1212
    %v1214 = vmul.f32 %v1205, %v1213
    %v1215 = vpack.c.bf16 %v1214, %v1214
    %1217 = vrot.lane.b32.xlu0 %v1215, 64
    %v1218 = vpop.permute.xlu0 %1217
    %v1220 = vsel %vm255, %v1218, 0
    %1222 = vmatprep.subr.bf16.mxu0 %v452
    %1223 = vmatpush1.bf16.msra.mxu0 %v451
    %1224 = vmatprep.subr.bf16.mxu0 %v454
    %1225 = vmatpush1.bf16.msra.mxu0 %v453
    %1226 = vmatprep.subr.bf16.mxu0 %v456
    %1227 = vmatpush1.bf16.msra.mxu0 %v455
    %1228 = vmatprep.subr.bf16.mxu0 %v458
    %1229 = vmatpush1.bf16.msra.mxu0 %v457
    %1230 = vmatprep.subr.bf16.mxu0 0
    %1231 = vmatpush1.bf16.msra.mxu0 0
    %1232 = vmatprep.subr.bf16.mxu0 0
    %1233 = vmatpush1.bf16.msra.mxu0 0
    %1234 = vmatprep.subr.bf16.mxu0 0
    %1235 = vmatpush1.bf16.msra.mxu0 0
    %1236 = vmatprep.subr.bf16.mxu0 0
    %1237 = vmatpush1.bf16.msra.mxu0 0
    %1238 = vmatprep.subr.bf16.mxu0 0
    %1239 = vmatpush1.bf16.msra.mxu0 0
    %1240 = vmatprep.subr.bf16.mxu0 0
    %1241 = vmatpush1.bf16.msra.mxu0 0
    %1242 = vmatprep.subr.bf16.mxu0 0
    %1243 = vmatpush1.bf16.msra.mxu0 0
    %1244 = vmatprep.subr.bf16.mxu0 0
    %1245 = vmatpush1.bf16.msra.mxu0 0
    %1246 = vmatprep.subr.bf16.mxu0 0
    %1247 = vmatpush1.bf16.msra.mxu0 0
    %1248 = vmatprep.subr.bf16.mxu0 0
    %1249 = vmatpush1.bf16.msra.mxu0 0
    %1250 = vmatprep.subr.bf16.mxu0 0
    %1251 = vmatpush1.bf16.msra.mxu0 0
    %1252 = vmatprep.subr.bf16.mxu0 0
    %1253 = vmatpush1.bf16.msra.mxu0 0
    %1254 = vmatprep.mubr.bf16.mxu0 0
    %1255 = vmatmul.mubr.bf16.gmra.mrb[0].mxu0 %v1220
    %v1256 = vpop.f32.mrb[0].mxu0
    %v1257 = vadd.f32 0.0, %v1256
    %v1258 = vpop.f32.mrb[0].mxu0
    %v1259 = vadd.f32 0.0, %v1258
    %v1260 = vpop.f32.mrb[0].mxu0
    %v1261 = vpop.f32.mrb[0].mxu0
    %1262 = vdwg.mxu0
    %v1263 = vadd.f32 %v1141, %v1257
    %v1264 = vadd.f32 %v1143, %v1259
    %v1265 = vxor.u32 %v1263, 2147483648
    %v1266 = vmul.f32 %v1265, 1.442695
    %v1267 = vpow.pop %v1266
    %v1268 = vadd.f32 %v1267, 1.0
    %v1269 = vrcp.pop %v1268
    %v1270 = vmul.f32 1.0, %v1269
    %v1271 = vtanh.pop %v1264
    %v1272 = vxor.u32 %v1264, 2147483648
    %v1273 = vmul.f32 %v1272, 1.442695
    %v1274 = vpow.pop %v1273
    %v1275 = vadd.f32 %v1274, 1.0
    %v1276 = vrcp.pop %v1275
    %v1277 = vmul.f32 1.0, %v1276
    %v1278 = vmul.f32 %v1270, %v1096
    %v1279 = vmul.f32 %v1270, %v1271
    %1281 = vrot.lane.b32.xlu0 %v1279, 64
    %v1282 = vpop.permute.xlu0 %1281
    %v1284 = vadd.f32 %v1278, %v1282
    %v1285 = vtanh.pop %v1284
    %v1286 = vmul.f32 %v1277, %v1285
    %v1287 = vpack.c.bf16 %v1286, %v1286
    %1289 = vrot.lane.b32.xlu0 %v1287, 64
    %v1290 = vpop.permute.xlu0 %1289
    %v1292 = vsel %vm255, %v1290, 0
    %1294 = vmatprep.subr.bf16.mxu0 %v240
    %1295 = vmatpush1.bf16.msra.mxu0 %v239
    %1296 = vmatprep.subr.bf16.mxu0 %v242
    %1297 = vmatpush1.bf16.msra.mxu0 %v241
    %1298 = vmatprep.subr.bf16.mxu0 %v244
    %1299 = vmatpush1.bf16.msra.mxu0 %v243
    %1300 = vmatprep.subr.bf16.mxu0 %v246
    %1301 = vmatpush1.bf16.msra.mxu0 %v245
    %1302 = vmatprep.subr.bf16.mxu0 0
    %1303 = vmatpush1.bf16.msra.mxu0 0
    %1304 = vmatprep.subr.bf16.mxu0 0
    %1305 = vmatpush1.bf16.msra.mxu0 0
    %1306 = vmatprep.subr.bf16.mxu0 0
    %1307 = vmatpush1.bf16.msra.mxu0 0
    %1308 = vmatprep.subr.bf16.mxu0 0
    %1309 = vmatpush1.bf16.msra.mxu0 0
    %1310 = vmatprep.subr.bf16.mxu0 0
    %1311 = vmatpush1.bf16.msra.mxu0 0
    %1312 = vmatprep.subr.bf16.mxu0 0
    %1313 = vmatpush1.bf16.msra.mxu0 0
    %1314 = vmatprep.subr.bf16.mxu0 0
    %1315 = vmatpush1.bf16.msra.mxu0 0
    %1316 = vmatprep.subr.bf16.mxu0 0
    %1317 = vmatpush1.bf16.msra.mxu0 0
    %1318 = vmatprep.subr.bf16.mxu0 0
    %1319 = vmatpush1.bf16.msra.mxu0 0
    %1320 = vmatprep.subr.bf16.mxu0 0
    %1321 = vmatpush1.bf16.msra.mxu0 0
    %1322 = vmatprep.subr.bf16.mxu0 0
    %1323 = vmatpush1.bf16.msra.mxu0 0
    %1324 = vmatprep.subr.bf16.mxu0 0
    %1325 = vmatpush1.bf16.msra.mxu0 0
    %1326 = vmatprep.mubr.bf16.mxu0 0
    %1327 = vmatmul.mubr.bf16.gmra.mrb[0].mxu0 %v1292
    %v1328 = vpop.f32.mrb[0].mxu0
    %v1329 = vadd.f32 %v208, %v1328
    %v1330 = vpop.f32.mrb[0].mxu0
    %v1331 = vadd.f32 %v212, %v1330
    %v1332 = vpop.f32.mrb[0].mxu0
    %v1333 = vpop.f32.mrb[0].mxu0
    %1334 = vdwg.mxu0
    %s1335 = scalar_lea.vmem [#allocation2], 80
    %v1336 = vld [vmem:[%s1335] sm:$0xff]
    %v1337 = vld [vmem:[%s1335 + $0x8] sm:$0xff]
    %1338 = vmatprep.subr.bf16.mxu0 %v335
    %1339 = vmatpush1.bf16.msra.mxu0 %v334
    %1340 = vmatprep.subr.bf16.mxu0 %v337
    %1341 = vmatpush1.bf16.msra.mxu0 %v336
    %1342 = vmatprep.subr.bf16.mxu0 %v339
    %1343 = vmatpush1.bf16.msra.mxu0 %v338
    %1344 = vmatprep.subr.bf16.mxu0 %v341
    %1345 = vmatpush1.bf16.msra.mxu0 %v340
    %1346 = vmatprep.subr.bf16.mxu0 0
    %1347 = vmatpush1.bf16.msra.mxu0 0
    %1348 = vmatprep.subr.bf16.mxu0 0
    %1349 = vmatpush1.bf16.msra.mxu0 0
    %1350 = vmatprep.subr.bf16.mxu0 0
    %1351 = vmatpush1.bf16.msra.mxu0 0
    %1352 = vmatprep.subr.bf16.mxu0 0
    %1353 = vmatpush1.bf16.msra.mxu0 0
    %1354 = vmatprep.subr.bf16.mxu0 0
    %1355 = vmatpush1.bf16.msra.mxu0 0
    %1356 = vmatprep.subr.bf16.mxu0 0
    %1357 = vmatpush1.bf16.msra.mxu0 0
    %1358 = vmatprep.subr.bf16.mxu0 0
    %1359 = vmatpush1.bf16.msra.mxu0 0
    %1360 = vmatprep.subr.bf16.mxu0 0
    %1361 = vmatpush1.bf16.msra.mxu0 0
    %1362 = vmatprep.subr.bf16.mxu0 0
    %1363 = vmatpush1.bf16.msra.mxu0 0
    %1364 = vmatprep.subr.bf16.mxu0 0
    %1365 = vmatpush1.bf16.msra.mxu0 0
    %1366 = vmatprep.subr.bf16.mxu0 0
    %1367 = vmatpush1.bf16.msra.mxu0 0
    %1368 = vmatprep.subr.bf16.mxu0 0
    %1369 = vmatpush1.bf16.msra.mxu0 0
    %1370 = vmatprep.mubr.bf16.mxu0 0
    %1371 = vmatmul.mubr.bf16.gmra.mrb[0].mxu0 %v1220
    %v1372 = vpop.f32.mrb[0].mxu0
    %v1373 = vadd.f32 0.0, %v1372
    %v1374 = vpop.f32.mrb[0].mxu0
    %v1375 = vadd.f32 0.0, %v1374
    %v1376 = vpop.f32.mrb[0].mxu0
    %v1377 = vpop.f32.mrb[0].mxu0
    %1378 = vdwg.mxu0
    %v1379 = vadd.f32 %v1336, %v1373
    %v1380 = vadd.f32 %v1337, %v1375
    %v1381 = vxor.u32 %v1379, 2147483648
    %v1382 = vmul.f32 %v1381, 1.442695
    %v1383 = vpow.pop %v1382
    %v1384 = vadd.f32 %v1383, 1.0
    %v1385 = vrcp.pop %v1384
    %v1386 = vmul.f32 1.0, %v1385
    %v1387 = vtanh.pop %v1380
    %v1388 = vxor.u32 %v1380, 2147483648
    %v1389 = vmul.f32 %v1388, 1.442695
    %v1390 = vpow.pop %v1389
    %v1391 = vadd.f32 %v1390, 1.0
    %v1392 = vrcp.pop %v1391
    %v1393 = vmul.f32 1.0, %v1392
    %v1394 = vmul.f32 %v1386, %v1212
    %v1395 = vmul.f32 %v1386, %v1387
    %1397 = vrot.lane.b32.xlu0 %v1395, 64
    %v1398 = vpop.permute.xlu0 %1397
    %v1400 = vadd.f32 %v1394, %v1398
    %v1401 = vtanh.pop %v1400
    %v1402 = vmul.f32 %v1393, %v1401
    %v1403 = vpack.c.bf16 %v1402, %v1402
    %1405 = vrot.lane.b32.xlu0 %v1403, 64
    %v1406 = vpop.permute.xlu0 %1405
    %v1408 = vsel %vm255, %v1406, 0
    %1410 = vmatprep.subr.bf16.mxu0 %v452
    %1411 = vmatpush1.bf16.msra.mxu0 %v451
    %1412 = vmatprep.subr.bf16.mxu0 %v454
    %1413 = vmatpush1.bf16.msra.mxu0 %v453
    %1414 = vmatprep.subr.bf16.mxu0 %v456
    %1415 = vmatpush1.bf16.msra.mxu0 %v455
    %1416 = vmatprep.subr.bf16.mxu0 %v458
    %1417 = vmatpush1.bf16.msra.mxu0 %v457
    %1418 = vmatprep.subr.bf16.mxu0 0
    %1419 = vmatpush1.bf16.msra.mxu0 0
    %1420 = vmatprep.subr.bf16.mxu0 0
    %1421 = vmatpush1.bf16.msra.mxu0 0
    %1422 = vmatprep.subr.bf16.mxu0 0
    %1423 = vmatpush1.bf16.msra.mxu0 0
    %1424 = vmatprep.subr.bf16.mxu0 0
    %1425 = vmatpush1.bf16.msra.mxu0 0
    %1426 = vmatprep.subr.bf16.mxu0 0
    %1427 = vmatpush1.bf16.msra.mxu0 0
    %1428 = vmatprep.subr.bf16.mxu0 0
    %1429 = vmatpush1.bf16.msra.mxu0 0
    %1430 = vmatprep.subr.bf16.mxu0 0
    %1431 = vmatpush1.bf16.msra.mxu0 0
    %1432 = vmatprep.subr.bf16.mxu0 0
    %1433 = vmatpush1.bf16.msra.mxu0 0
    %1434 = vmatprep.subr.bf16.mxu0 0
    %1435 = vmatpush1.bf16.msra.mxu0 0
    %1436 = vmatprep.subr.bf16.mxu0 0
    %1437 = vmatpush1.bf16.msra.mxu0 0
    %1438 = vmatprep.subr.bf16.mxu0 0
    %1439 = vmatpush1.bf16.msra.mxu0 0
    %1440 = vmatprep.subr.bf16.mxu0 0
    %1441 = vmatpush1.bf16.msra.mxu0 0
    %1442 = vmatprep.mubr.bf16.mxu0 0
    %1443 = vmatmul.mubr.bf16.gmra.mrb[0].mxu0 %v1408
    %v1444 = vpop.f32.mrb[0].mxu0
    %v1445 = vadd.f32 0.0, %v1444
    %v1446 = vpop.f32.mrb[0].mxu0
    %v1447 = vadd.f32 0.0, %v1446
    %v1448 = vpop.f32.mrb[0].mxu0
    %v1449 = vpop.f32.mrb[0].mxu0
    %1450 = vdwg.mxu0
    %v1451 = vadd.f32 %v1329, %v1445
    %v1452 = vadd.f32 %v1331, %v1447
    %v1453 = vxor.u32 %v1451, 2147483648
    %v1454 = vmul.f32 %v1453, 1.442695
    %v1455 = vpow.pop %v1454
    %v1456 = vadd.f32 %v1455, 1.0
    %v1457 = vrcp.pop %v1456
    %v1458 = vmul.f32 1.0, %v1457
    %v1459 = vtanh.pop %v1452
    %v1460 = vxor.u32 %v1452, 2147483648
    %v1461 = vmul.f32 %v1460, 1.442695
    %v1462 = vpow.pop %v1461
    %v1463 = vadd.f32 %v1462, 1.0
    %v1464 = vrcp.pop %v1463
    %v1465 = vmul.f32 1.0, %v1464
    %v1466 = vmul.f32 %v1458, %v1284
    %v1467 = vmul.f32 %v1458, %v1459
    %1469 = vrot.lane.b32.xlu0 %v1467, 64
    %v1470 = vpop.permute.xlu0 %1469
    %v1472 = vadd.f32 %v1466, %v1470
    %v1473 = vtanh.pop %v1472
    %v1474 = vmul.f32 %v1465, %v1473
    %v1475 = vpack.c.bf16 %v1474, %v1474
    %1477 = vrot.lane.b32.xlu0 %v1475, 64
    %v1478 = vpop.permute.xlu0 %1477
    %v1480 = vsel %vm255, %v1478, 0
    %1482 = vmatprep.subr.bf16.mxu0 %v240
    %1483 = vmatpush1.bf16.msra.mxu0 %v239
    %1484 = vmatprep.subr.bf16.mxu0 %v242
    %1485 = vmatpush1.bf16.msra.mxu0 %v241
    %1486 = vmatprep.subr.bf16.mxu0 %v244
    %1487 = vmatpush1.bf16.msra.mxu0 %v243
    %1488 = vmatprep.subr.bf16.mxu0 %v246
    %1489 = vmatpush1.bf16.msra.mxu0 %v245
    %1490 = vmatprep.subr.bf16.mxu0 0
    %1491 = vmatpush1.bf16.msra.mxu0 0
    %1492 = vmatprep.subr.bf16.mxu0 0
    %1493 = vmatpush1.bf16.msra.mxu0 0
    %1494 = vmatprep.subr.bf16.mxu0 0
    %1495 = vmatpush1.bf16.msra.mxu0 0
    %1496 = vmatprep.subr.bf16.mxu0 0
    %1497 = vmatpush1.bf16.msra.mxu0 0
    %1498 = vmatprep.subr.bf16.mxu0 0
    %1499 = vmatpush1.bf16.msra.mxu0 0
    %1500 = vmatprep.subr.bf16.mxu0 0
    %1501 = vmatpush1.bf16.msra.mxu0 0
    %1502 = vmatprep.subr.bf16.mxu0 0
    %1503 = vmatpush1.bf16.msra.mxu0 0
    %1504 = vmatprep.subr.bf16.mxu0 0
    %1505 = vmatpush1.bf16.msra.mxu0 0
    %1506 = vmatprep.subr.bf16.mxu0 0
    %1507 = vmatpush1.bf16.msra.mxu0 0
    %1508 = vmatprep.subr.bf16.mxu0 0
    %1509 = vmatpush1.bf16.msra.mxu0 0
    %1510 = vmatprep.subr.bf16.mxu0 0
    %1511 = vmatpush1.bf16.msra.mxu0 0
    %1512 = vmatprep.subr.bf16.mxu0 0
    %1513 = vmatpush1.bf16.msra.mxu0 0
    %1514 = vmatprep.mubr.bf16.mxu0 0
    %1515 = vmatmul.mubr.bf16.gmra.mrb[0].mxu0 %v1480
    %v1516 = vpop.f32.mrb[0].mxu0
    %v1517 = vadd.f32 %v208, %v1516
    %v1518 = vpop.f32.mrb[0].mxu0
    %v1519 = vadd.f32 %v212, %v1518
    %v1520 = vpop.f32.mrb[0].mxu0
    %v1521 = vpop.f32.mrb[0].mxu0
    %1522 = vdwg.mxu0
    %s1523 = scalar_lea.vmem [#allocation2], 96
    %v1524 = vld [vmem:[%s1523] sm:$0xff]
    %v1525 = vld [vmem:[%s1523 + $0x8] sm:$0xff]
    %1526 = vmatprep.subr.bf16.mxu0 %v335
    %1527 = vmatpush1.bf16.msra.mxu0 %v334
    %1528 = vmatprep.subr.bf16.mxu0 %v337
    %1529 = vmatpush1.bf16.msra.mxu0 %v336
    %1530 = vmatprep.subr.bf16.mxu0 %v339
    %1531 = vmatpush1.bf16.msra.mxu0 %v338
    %1532 = vmatprep.subr.bf16.mxu0 %v341
    %1533 = vmatpush1.bf16.msra.mxu0 %v340
    %1534 = vmatprep.subr.bf16.mxu0 0
    %1535 = vmatpush1.bf16.msra.mxu0 0
    %1536 = vmatprep.subr.bf16.mxu0 0
    %1537 = vmatpush1.bf16.msra.mxu0 0
    %1538 = vmatprep.subr.bf16.mxu0 0
    %1539 = vmatpush1.bf16.msra.mxu0 0
    %1540 = vmatprep.subr.bf16.mxu0 0
    %1541 = vmatpush1.bf16.msra.mxu0 0
    %1542 = vmatprep.subr.bf16.mxu0 0
    %1543 = vmatpush1.bf16.msra.mxu0 0
    %1544 = vmatprep.subr.bf16.mxu0 0
    %1545 = vmatpush1.bf16.msra.mxu0 0
    %1546 = vmatprep.subr.bf16.mxu0 0
    %1547 = vmatpush1.bf16.msra.mxu0 0
    %1548 = vmatprep.subr.bf16.mxu0 0
    %1549 = vmatpush1.bf16.msra.mxu0 0
    %1550 = vmatprep.subr.bf16.mxu0 0
    %1551 = vmatpush1.bf16.msra.mxu0 0
    %1552 = vmatprep.subr.bf16.mxu0 0
    %1553 = vmatpush1.bf16.msra.mxu0 0
    %1554 = vmatprep.subr.bf16.mxu0 0
    %1555 = vmatpush1.bf16.msra.mxu0 0
    %1556 = vmatprep.subr.bf16.mxu0 0
    %1557 = vmatpush1.bf16.msra.mxu0 0
    %1558 = vmatprep.mubr.bf16.mxu0 0
    %1559 = vmatmul.mubr.bf16.gmra.mrb[0].mxu0 %v1408
    %v1560 = vpop.f32.mrb[0].mxu0
    %v1561 = vadd.f32 0.0, %v1560
    %v1562 = vpop.f32.mrb[0].mxu0
    %v1563 = vadd.f32 0.0, %v1562
    %v1564 = vpop.f32.mrb[0].mxu0
    %v1565 = vpop.f32.mrb[0].mxu0
    %1566 = vdwg.mxu0
    %v1567 = vadd.f32 %v1524, %v1561
    %v1568 = vadd.f32 %v1525, %v1563
    %v1569 = vxor.u32 %v1567, 2147483648
    %v1570 = vmul.f32 %v1569, 1.442695
    %v1571 = vpow.pop %v1570
    %v1572 = vadd.f32 %v1571, 1.0
    %v1573 = vrcp.pop %v1572
    %v1574 = vmul.f32 1.0, %v1573
    %v1575 = vtanh.pop %v1568
    %v1576 = vxor.u32 %v1568, 2147483648
    %v1577 = vmul.f32 %v1576, 1.442695
    %v1578 = vpow.pop %v1577
    %v1579 = vadd.f32 %v1578, 1.0
    %v1580 = vrcp.pop %v1579
    %v1581 = vmul.f32 1.0, %v1580
    %v1582 = vmul.f32 %v1574, %v1400
    %v1583 = vmul.f32 %v1574, %v1575
    %1585 = vrot.lane.b32.xlu0 %v1583, 64
    %v1586 = vpop.permute.xlu0 %1585
    %v1588 = vadd.f32 %v1582, %v1586
    %v1589 = vtanh.pop %v1588
    %v1590 = vmul.f32 %v1581, %v1589
    %v1591 = vpack.c.bf16 %v1590, %v1590
    %1593 = vrot.lane.b32.xlu0 %v1591, 64
    %v1594 = vpop.permute.xlu0 %1593
    %v1596 = vsel %vm255, %v1594, 0
    %1598 = vmatprep.subr.bf16.mxu0 %v452
    %1599 = vmatpush1.bf16.msra.mxu0 %v451
    %1600 = vmatprep.subr.bf16.mxu0 %v454
    %1601 = vmatpush1.bf16.msra.mxu0 %v453
    %1602 = vmatprep.subr.bf16.mxu0 %v456
    %1603 = vmatpush1.bf16.msra.mxu0 %v455
    %1604 = vmatprep.subr.bf16.mxu0 %v458
    %1605 = vmatpush1.bf16.msra.mxu0 %v457
    %1606 = vmatprep.subr.bf16.mxu0 0
    %1607 = vmatpush1.bf16.msra.mxu0 0
    %1608 = vmatprep.subr.bf16.mxu0 0
    %1609 = vmatpush1.bf16.msra.mxu0 0
    %1610 = vmatprep.subr.bf16.mxu0 0
    %1611 = vmatpush1.bf16.msra.mxu0 0
    %1612 = vmatprep.subr.bf16.mxu0 0
    %1613 = vmatpush1.bf16.msra.mxu0 0
    %1614 = vmatprep.subr.bf16.mxu0 0
    %1615 = vmatpush1.bf16.msra.mxu0 0
    %1616 = vmatprep.subr.bf16.mxu0 0
    %1617 = vmatpush1.bf16.msra.mxu0 0
    %1618 = vmatprep.subr.bf16.mxu0 0
    %1619 = vmatpush1.bf16.msra.mxu0 0
    %1620 = vmatprep.subr.bf16.mxu0 0
    %1621 = vmatpush1.bf16.msra.mxu0 0
    %1622 = vmatprep.subr.bf16.mxu0 0
    %1623 = vmatpush1.bf16.msra.mxu0 0
    %1624 = vmatprep.subr.bf16.mxu0 0
    %1625 = vmatpush1.bf16.msra.mxu0 0
    %1626 = vmatprep.subr.bf16.mxu0 0
    %1627 = vmatpush1.bf16.msra.mxu0 0
    %1628 = vmatprep.subr.bf16.mxu0 0
    %1629 = vmatpush1.bf16.msra.mxu0 0
    %1630 = vmatprep.mubr.bf16.mxu0 0
    %1631 = vmatmul.mubr.bf16.gmra.mrb[0].mxu0 %v1596
    %v1632 = vpop.f32.mrb[0].mxu0
    %v1633 = vadd.f32 0.0, %v1632
    %v1634 = vpop.f32.mrb[0].mxu0
    %v1635 = vadd.f32 0.0, %v1634
    %v1636 = vpop.f32.mrb[0].mxu0
    %v1637 = vpop.f32.mrb[0].mxu0
    %1638 = vdwg.mxu0
    %v1639 = vadd.f32 %v1517, %v1633
    %v1640 = vadd.f32 %v1519, %v1635
    %v1641 = vxor.u32 %v1639, 2147483648
    %v1642 = vmul.f32 %v1641, 1.442695
    %v1643 = vpow.pop %v1642
    %v1644 = vadd.f32 %v1643, 1.0
    %v1645 = vrcp.pop %v1644
    %v1646 = vmul.f32 1.0, %v1645
    %v1647 = vtanh.pop %v1640
    %v1648 = vxor.u32 %v1640, 2147483648
    %v1649 = vmul.f32 %v1648, 1.442695
    %v1650 = vpow.pop %v1649
    %v1651 = vadd.f32 %v1650, 1.0
    %v1652 = vrcp.pop %v1651
    %v1653 = vmul.f32 1.0, %v1652
    %v1654 = vmul.f32 %v1646, %v1472
    %v1655 = vmul.f32 %v1646, %v1647
    %1657 = vrot.lane.b32.xlu0 %v1655, 64
    %v1658 = vpop.permute.xlu0 %1657
    %v1660 = vadd.f32 %v1654, %v1658
    %v1661 = vtanh.pop %v1660
    %v1662 = vmul.f32 %v1653, %v1661
    %v1663 = vpack.c.bf16 %v1662, %v1662
    %1665 = vrot.lane.b32.xlu0 %v1663, 64
    %v1666 = vpop.permute.xlu0 %1665
    %v1668 = vsel %vm255, %v1666, 0
    %1670 = vmatprep.subr.bf16.mxu0 %v240
    %1671 = vmatpush1.bf16.msra.mxu0 %v239
    %1672 = vmatprep.subr.bf16.mxu0 %v242
    %1673 = vmatpush1.bf16.msra.mxu0 %v241
    %1674 = vmatprep.subr.bf16.mxu0 %v244
    %1675 = vmatpush1.bf16.msra.mxu0 %v243
    %1676 = vmatprep.subr.bf16.mxu0 %v246
    %1677 = vmatpush1.bf16.msra.mxu0 %v245
    %1678 = vmatprep.subr.bf16.mxu0 0
    %1679 = vmatpush1.bf16.msra.mxu0 0
    %1680 = vmatprep.subr.bf16.mxu0 0
    %1681 = vmatpush1.bf16.msra.mxu0 0
    %1682 = vmatprep.subr.bf16.mxu0 0
    %1683 = vmatpush1.bf16.msra.mxu0 0
    %1684 = vmatprep.subr.bf16.mxu0 0
    %1685 = vmatpush1.bf16.msra.mxu0 0
    %1686 = vmatprep.subr.bf16.mxu0 0
    %1687 = vmatpush1.bf16.msra.mxu0 0
    %1688 = vmatprep.subr.bf16.mxu0 0
    %1689 = vmatpush1.bf16.msra.mxu0 0
    %1690 = vmatprep.subr.bf16.mxu0 0
    %1691 = vmatpush1.bf16.msra.mxu0 0
    %1692 = vmatprep.subr.bf16.mxu0 0
    %1693 = vmatpush1.bf16.msra.mxu0 0
    %1694 = vmatprep.subr.bf16.mxu0 0
    %1695 = vmatpush1.bf16.msra.mxu0 0
    %1696 = vmatprep.subr.bf16.mxu0 0
    %1697 = vmatpush1.bf16.msra.mxu0 0
    %1698 = vmatprep.subr.bf16.mxu0 0
    %1699 = vmatpush1.bf16.msra.mxu0 0
    %1700 = vmatprep.subr.bf16.mxu0 0
    %1701 = vmatpush1.bf16.msra.mxu0 0
    %1702 = vmatprep.mubr.bf16.mxu0 0
    %1703 = vmatmul.mubr.bf16.gmra.mrb[0].mxu0 %v1668
    %v1704 = vpop.f32.mrb[0].mxu0
    %v1705 = vadd.f32 %v208, %v1704
    %v1706 = vpop.f32.mrb[0].mxu0
    %v1707 = vadd.f32 %v212, %v1706
    %v1708 = vpop.f32.mrb[0].mxu0
    %v1709 = vpop.f32.mrb[0].mxu0
    %1710 = vdwg.mxu0
    %s1711 = scalar_lea.vmem [#allocation2], 112
    %v1712 = vld [vmem:[%s1711] sm:$0xff]
    %v1713 = vld [vmem:[%s1711 + $0x8] sm:$0xff]
    %1714 = vmatprep.subr.bf16.mxu0 %v335
    %1715 = vmatpush1.bf16.msra.mxu0 %v334
    %1716 = vmatprep.subr.bf16.mxu0 %v337
    %1717 = vmatpush1.bf16.msra.mxu0 %v336
    %1718 = vmatprep.subr.bf16.mxu0 %v339
    %1719 = vmatpush1.bf16.msra.mxu0 %v338
    %1720 = vmatprep.subr.bf16.mxu0 %v341
    %1721 = vmatpush1.bf16.msra.mxu0 %v340
    %1722 = vmatprep.subr.bf16.mxu0 0
    %1723 = vmatpush1.bf16.msra.mxu0 0
    %1724 = vmatprep.subr.bf16.mxu0 0
    %1725 = vmatpush1.bf16.msra.mxu0 0
    %1726 = vmatprep.subr.bf16.mxu0 0
    %1727 = vmatpush1.bf16.msra.mxu0 0
    %1728 = vmatprep.subr.bf16.mxu0 0
    %1729 = vmatpush1.bf16.msra.mxu0 0
    %1730 = vmatprep.subr.bf16.mxu0 0
    %1731 = vmatpush1.bf16.msra.mxu0 0
    %1732 = vmatprep.subr.bf16.mxu0 0
    %1733 = vmatpush1.bf16.msra.mxu0 0
    %1734 = vmatprep.subr.bf16.mxu0 0
    %1735 = vmatpush1.bf16.msra.mxu0 0
    %1736 = vmatprep.subr.bf16.mxu0 0
    %1737 = vmatpush1.bf16.msra.mxu0 0
    %1738 = vmatprep.subr.bf16.mxu0 0
    %1739 = vmatpush1.bf16.msra.mxu0 0
    %1740 = vmatprep.subr.bf16.mxu0 0
    %1741 = vmatpush1.bf16.msra.mxu0 0
    %1742 = vmatprep.subr.bf16.mxu0 0
    %1743 = vmatpush1.bf16.msra.mxu0 0
    %1744 = vmatprep.subr.bf16.mxu0 0
    %1745 = vmatpush1.bf16.msra.mxu0 0
    %1746 = vmatprep.mubr.bf16.mxu0 0
    %1747 = vmatmul.mubr.bf16.gmra.mrb[0].mxu0 %v1596
    %v1748 = vpop.f32.mrb[0].mxu0
    %v1749 = vadd.f32 0.0, %v1748
    %v1750 = vpop.f32.mrb[0].mxu0
    %v1751 = vadd.f32 0.0, %v1750
    %v1752 = vpop.f32.mrb[0].mxu0
    %v1753 = vpop.f32.mrb[0].mxu0
    %1754 = vdwg.mxu0
    %v1755 = vadd.f32 %v1712, %v1749
    %v1756 = vadd.f32 %v1713, %v1751
    %v1757 = vxor.u32 %v1755, 2147483648
    %v1758 = vmul.f32 %v1757, 1.442695
    %v1759 = vpow.pop %v1758
    %v1760 = vadd.f32 %v1759, 1.0
    %v1761 = vrcp.pop %v1760
    %v1762 = vmul.f32 1.0, %v1761
    %v1763 = vtanh.pop %v1756
    %v1764 = vxor.u32 %v1756, 2147483648
    %v1765 = vmul.f32 %v1764, 1.442695
    %v1766 = vpow.pop %v1765
    %v1767 = vadd.f32 %v1766, 1.0
    %v1768 = vrcp.pop %v1767
    %v1769 = vmul.f32 1.0, %v1768
    %v1770 = vmul.f32 %v1762, %v1588
    %v1771 = vmul.f32 %v1762, %v1763
    %1773 = vrot.lane.b32.xlu0 %v1771, 64
    %v1774 = vpop.permute.xlu0 %1773
    %v1776 = vadd.f32 %v1770, %v1774
    %v1777 = vtanh.pop %v1776
    %v1778 = vmul.f32 %v1769, %v1777
    %v1779 = vpack.c.bf16 %v1778, %v1778
    %1781 = vrot.lane.b32.xlu0 %v1779, 64
    %v1782 = vpop.permute.xlu0 %1781
    %v1784 = vsel %vm255, %v1782, 0
    %1786 = vmatprep.subr.bf16.mxu0 %v452
    %1787 = vmatpush1.bf16.msra.mxu0 %v451
    %1788 = vmatprep.subr.bf16.mxu0 %v454
    %1789 = vmatpush1.bf16.msra.mxu0 %v453
    %1790 = vmatprep.subr.bf16.mxu0 %v456
    %1791 = vmatpush1.bf16.msra.mxu0 %v455
    %1792 = vmatprep.subr.bf16.mxu0 %v458
    %1793 = vmatpush1.bf16.msra.mxu0 %v457
    %1794 = vmatprep.subr.bf16.mxu0 0
    %1795 = vmatpush1.bf16.msra.mxu0 0
    %1796 = vmatprep.subr.bf16.mxu0 0
    %1797 = vmatpush1.bf16.msra.mxu0 0
    %1798 = vmatprep.subr.bf16.mxu0 0
    %1799 = vmatpush1.bf16.msra.mxu0 0
    %1800 = vmatprep.subr.bf16.mxu0 0
    %1801 = vmatpush1.bf16.msra.mxu0 0
    %1802 = vmatprep.subr.bf16.mxu0 0
    %1803 = vmatpush1.bf16.msra.mxu0 0
    %1804 = vmatprep.subr.bf16.mxu0 0
    %1805 = vmatpush1.bf16.msra.mxu0 0
    %1806 = vmatprep.subr.bf16.mxu0 0
    %1807 = vmatpush1.bf16.msra.mxu0 0
    %1808 = vmatprep.subr.bf16.mxu0 0
    %1809 = vmatpush1.bf16.msra.mxu0 0
    %1810 = vmatprep.subr.bf16.mxu0 0
    %1811 = vmatpush1.bf16.msra.mxu0 0
    %1812 = vmatprep.subr.bf16.mxu0 0
    %1813 = vmatpush1.bf16.msra.mxu0 0
    %1814 = vmatprep.subr.bf16.mxu0 0
    %1815 = vmatpush1.bf16.msra.mxu0 0
    %1816 = vmatprep.subr.bf16.mxu0 0
    %1817 = vmatpush1.bf16.msra.mxu0 0
    %1818 = vmatprep.mubr.bf16.mxu0 0
    %1819 = vmatmul.mubr.bf16.gmra.mrb[0].mxu0 %v1784
    %v1820 = vpop.f32.mrb[0].mxu0
    %v1821 = vadd.f32 0.0, %v1820
    %v1822 = vpop.f32.mrb[0].mxu0
    %v1823 = vadd.f32 0.0, %v1822
    %v1824 = vpop.f32.mrb[0].mxu0
    %v1825 = vpop.f32.mrb[0].mxu0
    %1826 = vdwg.mxu0
    %v1827 = vadd.f32 %v1705, %v1821
    %v1828 = vadd.f32 %v1707, %v1823
    %v1829 = vxor.u32 %v1827, 2147483648
    %v1830 = vmul.f32 %v1829, 1.442695
    %v1831 = vpow.pop %v1830
    %v1832 = vadd.f32 %v1831, 1.0
    %v1833 = vrcp.pop %v1832
    %v1834 = vmul.f32 1.0, %v1833
    %v1835 = vtanh.pop %v1828
    %v1836 = vxor.u32 %v1828, 2147483648
    %v1837 = vmul.f32 %v1836, 1.442695
    %v1838 = vpow.pop %v1837
    %v1839 = vadd.f32 %v1838, 1.0
    %v1840 = vrcp.pop %v1839
    %v1841 = vmul.f32 1.0, %v1840
    %v1842 = vmul.f32 %v1834, %v1660
    %v1843 = vmul.f32 %v1834, %v1835
    %1845 = vrot.lane.b32.xlu0 %v1843, 64
    %v1846 = vpop.permute.xlu0 %1845
    %v1848 = vadd.f32 %v1842, %v1846
    %v1849 = vtanh.pop %v1848
    %v1850 = vmul.f32 %v1841, %v1849
    %v1851 = vld [vmem:[#allocation8] sm:$0xff]
    %v1852 = vld [vmem:[#allocation8 + $0x8] sm:$0xff]
    %v1853 = vld [vmem:[#allocation8 + $0x10] sm:$0xff]
    %v1854 = vld [vmem:[#allocation8 + $0x18] sm:$0xff]
    %v1855 = vld [vmem:[#allocation8 + $0x20] sm:$0xff]
    %v1856 = vld [vmem:[#allocation8 + $0x28] sm:$0xff]
    %v1857 = vld [vmem:[#allocation8 + $0x30] sm:$0xff]
    %v1858 = vld [vmem:[#allocation8 + $0x38] sm:$0xff]
    %v1859 = vld [vmem:[%s8] sm:$0x1]
    %v1861 = vlaneseq
    %v1862 = vshrl.u32 %v1861, 7
    %v1863 = vsub.s32 0, %v1862
    %v1864 = vrot.slane %v1859, %v1863
    %1867 = vrot.lane.b32.xlu0 %v1850, 64
    %v1868 = vpop.permute.xlu0 %1867
    %v1869 = vsel %vm255, %v1868, 0
    %1871 = vmatprep.subr.mxu0 0.0
    %1872 = vmatpush1.msra.mxu0 %v1851
    %1873 = vmatprep.subr.mxu0 0.0
    %1874 = vmatpush1.msra.mxu0 %v1852
    %1875 = vmatprep.subr.mxu0 0.0
    %1876 = vmatpush1.msra.mxu0 %v1853
    %1877 = vmatprep.subr.mxu0 0.0
    %1878 = vmatpush1.msra.mxu0 %v1854
    %1879 = vmatprep.subr.mxu0 0.0
    %1880 = vmatpush1.msra.mxu0 %v1855
    %1881 = vmatprep.subr.mxu0 0.0
    %1882 = vmatpush1.msra.mxu0 %v1856
    %1883 = vmatprep.subr.mxu0 0.0
    %1884 = vmatpush1.msra.mxu0 %v1857
    %1885 = vmatprep.subr.mxu0 0.0
    %1886 = vmatpush1.msra.mxu0 %v1858
    %1887 = vmatprep.subr.mxu0 0.0
    %1888 = vmatpush1.msra.mxu0 0.0
    %1889 = vmatprep.subr.mxu0 0.0
    %1890 = vmatpush1.msra.mxu0 0.0
    %1891 = vmatprep.subr.mxu0 0.0
    %1892 = vmatpush1.msra.mxu0 0.0
    %1893 = vmatprep.subr.mxu0 0.0
    %1894 = vmatpush1.msra.mxu0 0.0
    %1895 = vmatprep.subr.mxu0 0.0
    %1896 = vmatpush1.msra.mxu0 0.0
    %1897 = vmatprep.subr.mxu0 0.0
    %1898 = vmatpush1.msra.mxu0 0.0
    %1899 = vmatprep.subr.mxu0 0.0
    %1900 = vmatpush1.msra.mxu0 0.0
    %1901 = vmatprep.subr.mxu0 0.0
    %1902 = vmatpush1.msra.mxu0 0.0
    %1903 = vmatprep.subr.mxu0 0.0
    %1904 = vmatpush1.msra.mxu0 0.0
    %1905 = vmatprep.subr.mxu0 0.0
    %1906 = vmatpush1.msra.mxu0 0.0
    %1907 = vmatprep.subr.mxu0 0.0
    %1908 = vmatpush1.msra.mxu0 0.0
    %1909 = vmatprep.subr.mxu0 0.0
    %1910 = vmatpush1.msra.mxu0 0.0
    %1911 = vmatprep.subr.mxu0 0.0
    %1912 = vmatpush1.msra.mxu0 0.0
    %1913 = vmatprep.subr.mxu0 0.0
    %1914 = vmatpush1.msra.mxu0 0.0
    %1915 = vmatprep.subr.mxu0 0.0
    %1916 = vmatpush1.msra.mxu0 0.0
    %1917 = vmatprep.subr.mxu0 0.0
    %1918 = vmatpush1.msra.mxu0 0.0
    %1919 = vmatprep.subr.mxu0 0.0
    %1920 = vmatpush1.msra.mxu0 0.0
    %1921 = vmatprep.subr.mxu0 0.0
    %1922 = vmatpush1.msra.mxu0 0.0
    %1923 = vmatprep.subr.mxu0 0.0
    %1924 = vmatpush1.msra.mxu0 0.0
    %1925 = vmatprep.subr.mxu0 0.0
    %1926 = vmatpush1.msra.mxu0 0.0
    %1927 = vmatprep.subr.mxu0 0.0
    %1928 = vmatpush1.msra.mxu0 0.0
    %1929 = vmatprep.subr.mxu0 0.0
    %1930 = vmatpush1.msra.mxu0 0.0
    %1931 = vmatprep.subr.mxu0 0.0
    %1932 = vmatpush1.msra.mxu0 0.0
    %1933 = vmatprep.subr.mxu0 0.0
    %1934 = vmatpush1.msra.mxu0 0.0
    %1935 = vmatprep.mubr.f32.mxu0 0.0
    %1936 = vmatmul.mubr.f32.gmra.mrb[0].mxu0 %v1869
    %v1937 = vpop.f32.mrb[0].mxu0
    %v1938 = vadd.f32 %v1864, %v1937
    %v1939 = vpop.f32.mrb[0].mxu0
    %1940 = vdwg.mxu0
    %1941 = vst [vmem:[#allocation9] sm:$0xff] %v1938
    // Predicated region
    $region50: #{tpu_custom_call.1} parent=1 // pred_check
      _
    $region51: #{tpu_custom_call.1} parent=1 // pred_check_branch
      %1943 = sbr.rel (0) target = $region53
    $region52: #{tpu_custom_call.1} parent=1 // pred_region
      %s1945 = ssub.s32 128, 128
      %1946 = vsyncadd [#allocation5], %s1945
      %s1948 = sshll.u32 [#allocation9], 4
      %s1949 = int_to_ptr.vmem [resolvable:$true] %s1948
      %1951 = dma.vmem_to_hbm [thread:$0]  %s1949, 128, %s9, [#allocation5]
    $region53: #{tpu_custom_call.1} parent=1 // pred_fallthru
      _
    // Predicated region
    $region54: #{tpu_custom_call.1} parent=1 // pred_check
      _
    $region55: #{tpu_custom_call.1} parent=1 // pred_check_branch
      %1953 = sbr.rel (0) target = $region57
    $region56: #{tpu_custom_call.1} parent=1 // pred_region
      %1954 = dma.done [#allocation5], 128
    $region57: #{tpu_custom_call.1} parent=1 // pred_fallthru
      _
    %1955 = vsyncpa [#allocation4], 1
    %1956 = vsyncpa [#allocation7], 1
    %1957 = vsyncpa [#allocation5], 1

</llo_original>
